<compile_context>
chip_gen: v7x
topology: tpu7x:2x2x1
jax: 0.10.0
libtpu: 0.0.40
codegen_flags: <defaults>
</compile_context>

<pallas_src>
import functools

import jax
import jax.numpy as jnp
from jax import lax
from jax.experimental import pallas as pl
from jax.experimental.pallas import tpu as pltpu

IGNORE_INDEX = -100
EPS = 1e-10


def _soft_label_loss_kernel(score_ref, mask_ref, labels_ref, psn_ref,
                            ce_ref, sm_ref,
                            score_acc, mask_acc, cls_acc, valid_acc,
                            *, ts_total, ignore_index, eps):
    ts = pl.program_id(1)

    @pl.when(ts == 0)
    def _init():
        score_acc[...] = jnp.zeros_like(score_acc)
        mask_acc[...] = jnp.zeros_like(mask_acc)
        cls_acc[...] = jnp.zeros_like(cls_acc)
        valid_acc[...] = jnp.zeros_like(valid_acc)

    score = score_ref[...]                       # (Bt, C, Tt) native dtype (bf16)
    mask = mask_ref[...]                         # (Bt, Tt)    native narrow dtype
    labels = labels_ref[...]                     # (Bt, Tt)    int32

    # Masked temporal sum of logits. The product stays in the score's native
    # dtype (mask is exactly 0/1, so it is exact); accumulate in f32.
    mask_nat = mask.astype(score.dtype)
    score_acc[...] += jnp.sum(score * mask_nat[:, None, :], axis=-1,
                              dtype=jnp.float32)
    mask_acc[...] += jnp.sum(mask.astype(jnp.float32), axis=-1, keepdims=True)

    # Per-class histogram of valid labels at sub-sampled resolution
    # (fused compare + mask + lane reduce; no materialized one-hot in HBM).
    valid = labels != ignore_index                                      # (Bt, Tt)
    _, c = cls_acc.shape
    tt = labels.shape[-1]
    cls_iota = lax.broadcasted_iota(jnp.int32, (1, c, tt), 1)           # sublane iota
    hits = (labels[:, None, :] == cls_iota) & valid[:, None, :]         # (Bt, C, Tt)
    cls_acc[...] += jnp.sum(hits.astype(jnp.float32), axis=-1)
    valid_acc[...] += jnp.sum(valid.astype(jnp.float32), axis=-1, keepdims=True)

    @pl.when(ts == pl.num_programs(1) - 1)
    def _finalize():
        # Everything here is (Bt, C) / (Bt, 1) sized -> exact divides are free.
        cls_score = score_acc[...] / (mask_acc[...] + eps)              # (Bt, C)
        smooth_label = cls_acc[...] * (1.0 / ts_total)                  # (Bt, C)
        sample_mask = (valid_acc[...] > 0.0).astype(jnp.float32)        # (Bt, 1)

        # Stable soft-target cross entropy: -sum_c p_c * log_softmax(x)_c
        x_max = jnp.max(cls_score, axis=-1, keepdims=True)
        shifted = cls_score - x_max
        lse = jnp.log(jnp.sum(jnp.exp(shifted), axis=-1, keepdims=True))
        log_probs = shifted - lse
        ce = -jnp.sum(smooth_label * log_probs, axis=-1, keepdims=True)  # (Bt, 1)

        psn = psn_ref[...].astype(jnp.float32)                           # (Bt, 1)
        ce_ref[...] = ce * sample_mask / (psn + eps)
        sm_ref[...] = sample_mask


def _pick_ts_tile(ts):
    for cand in (512, 256, 128):
        if ts % cand == 0:
            return cand
    return ts


def recognition_segmentation_loss(score, masks, labels, precise_sliding_num, *,
                                  sample_rate=4, loss_weight=1.0,
                                  ignore_index=IGNORE_INDEX):
    """Pallas-backed equivalent of RecognitionSegmentationLoss(label_mode='soft')."""
    B, C, Ts = score.shape
    T = labels.shape[1]
    assert T == Ts * sample_rate, "labels/masks length must equal Ts * sample_rate"

    # Temporal sub-sampling (the RecognitionSegmentationLoss wrapper slice).
    # Done here so the kernel's HBM streams are already 1/sample_rate wide.
    labels_s = labels[:, ::sample_rate].astype(jnp.int32)       # (B, Ts)
    masks_s = masks[:, ::sample_rate]                           # (B, Ts), native dtype
    psn = precise_sliding_num.reshape(B, 1).astype(jnp.float32)

    # Lane-dense Ts tiles; B tiled in multiples of 8 when possible.
    ts_tile = _pick_ts_tile(Ts)
    b_tile = 8 if (B % 8 == 0) else B
    grid = (B // b_tile, Ts // ts_tile)

    # Explicit VMEM budget (portable across v5e/v6e/v7x scoped-VMEM defaults).
    tile_bytes = (b_tile * C * ts_tile * jnp.dtype(score.dtype).itemsize
                  + b_tile * ts_tile * (jnp.dtype(masks_s.dtype).itemsize + 4))
    vmem_limit = int(max(16 * 2**20, min(48 * 2**20, 8 * tile_bytes)))

    kernel = functools.partial(
        _soft_label_loss_kernel,
        ts_total=Ts,
        ignore_index=int(ignore_index),
        eps=EPS,
    )

    grid_spec = pltpu.PrefetchScalarGridSpec(
        num_scalar_prefetch=0,
        grid=grid,
        in_specs=[
            pl.BlockSpec((b_tile, C, ts_tile), lambda i, j: (i, 0, j)),   # score
            pl.BlockSpec((b_tile, ts_tile), lambda i, j: (i, j)),         # masks_s
            pl.BlockSpec((b_tile, ts_tile), lambda i, j: (i, j)),         # labels_s
            pl.BlockSpec((b_tile, 1), lambda i, j: (i, 0)),               # psn
        ],
        out_specs=[
            pl.BlockSpec((b_tile, 1), lambda i, j: (i, 0)),               # ce*mask/psn
            pl.BlockSpec((b_tile, 1), lambda i, j: (i, 0)),               # sample_mask
        ],
        scratch_shapes=[
            pltpu.VMEM((b_tile, C), jnp.float32),   # masked score sum
            pltpu.VMEM((b_tile, 1), jnp.float32),   # mask sum
            pltpu.VMEM((b_tile, C), jnp.float32),   # per-class valid-label count
            pltpu.VMEM((b_tile, 1), jnp.float32),   # valid-label count
        ],
    )

    ce_w, sm = pl.pallas_call(
        kernel,
        out_shape=(jax.ShapeDtypeStruct((B, 1), jnp.float32),
                   jax.ShapeDtypeStruct((B, 1), jnp.float32)),
        grid_spec=grid_spec,
        compiler_params=pltpu.CompilerParams(
            dimension_semantics=("parallel", "arbitrary"),
            vmem_limit_bytes=vmem_limit),
    )(score, masks_s, labels_s, psn)

    # Tiny O(B) scalar epilogue (B axis is parallel-sharded in the grid, so the
    # cross-batch scalar reduce cannot live inside the kernel).
    loss = (jnp.sum(ce_w) / (jnp.sum(sm) + EPS)) * loss_weight
    return {"loss": loss}


def _reference_loss(score, masks, labels, psn, *, sample_rate, loss_weight,
                    ignore_index):
    """Pure-JAX reference mirroring the PyTorch module (sanity check)."""
    score = score.astype(jnp.float32)
    labels_s = labels[:, ::sample_rate]
    masks_s = masks[:, ::sample_rate].astype(jnp.float32)
    B, C, Ts = score.shape
    msum = jnp.sum(masks_s, axis=-1, keepdims=True)
    cls_score = jnp.sum(score * masks_s[:, None, :], axis=-1) / (msum + EPS)
    valid = labels_s != ignore_index
    refine = jnp.where(valid, labels_s, 0)
    ce_y = jax.nn.one_hot(refine, C)
    ce_y = jnp.where(valid[:, :, None], ce_y, 0.0)
    smooth = jnp.sum(ce_y, axis=1) / Ts
    mask = jnp.where(jnp.sum(smooth, axis=1) != 0, 1.0, 0.0)
    logp = jax.nn.log_softmax(cls_score, axis=-1)
    ce = -jnp.sum(smooth * logp, axis=-1)
    loss = jnp.sum(ce * mask / (psn + EPS)) / (jnp.sum(mask) + EPS)
    return loss * loss_weight


if __name__ == "__main__":
    # Shapes chosen small but large enough to exercise the (B, Ts) grid:
    # grid = (16/8, 1024/512) = (2, 2).
    B, num_classes, T, sample_rate = 16, 8, 4096, 4
    Ts = T // sample_rate

    key = jax.random.PRNGKey(0)
    k1, k2, k3, k4, k5 = jax.random.split(key, 5)

    # model_output['output']: (B, C, Ts) logits in the model's native bf16.
    score = jax.random.normal(k1, (B, num_classes, Ts),
                              dtype=jnp.float32).astype(jnp.bfloat16)
    # labels: (B, T) int with ignore_index entries.
    labels = jax.random.randint(k2, (B, T), 0, num_classes, dtype=jnp.int32)
    ignore_mask = jax.random.bernoulli(k3, 0.1, (B, T))
    labels = jnp.where(ignore_mask, IGNORE_INDEX, labels)
    # masks: (B, T) binary, kept in a narrow dtype (0/1 exact in bf16).
    masks = jax.random.bernoulli(k4, 0.8, (B, T)).astype(jnp.bfloat16)
    # precise_sliding_num: (B,) positive float.
    precise_sliding_num = jax.random.uniform(
        k5, (B,), minval=1.0, maxval=4.0).astype(jnp.float32)

    out = recognition_segmentation_loss(
        score, masks, labels, precise_sliding_num,
        sample_rate=sample_rate, loss_weight=1.0)
    loss = jax.block_until_ready(out["loss"])

    ref = _reference_loss(score, masks, labels, precise_sliding_num,
                          sample_rate=sample_rate, loss_weight=1.0,
                          ignore_index=IGNORE_INDEX)
    assert jnp.allclose(loss, ref, atol=1e-4, rtol=1e-3), (loss, ref)

    print("KERNEL_OK")
</pallas_src>

<mosaic_0001>
module attributes {stable_mosaic.version = 11 : i64} {
  func.func @_soft_label_loss_kernel(%arg0: i32, %arg1: i32, %arg2: memref<8x8x512xbf16, #tpu.memory_space<vmem>>, %arg3: memref<8x512xbf16, #tpu.memory_space<vmem>>, %arg4: memref<8x512xi32, #tpu.memory_space<vmem>>, %arg5: memref<8x1xf32, #tpu.memory_space<vmem>>, %arg6: memref<8x1xf32, #tpu.memory_space<vmem>>, %arg7: memref<8x1xf32, #tpu.memory_space<vmem>>, %arg8: memref<8x8xf32, #tpu.memory_space<vmem>>, %arg9: memref<8x1xf32, #tpu.memory_space<vmem>>, %arg10: memref<8x8xf32, #tpu.memory_space<vmem>>, %arg11: memref<8x1xf32, #tpu.memory_space<vmem>>) attributes {dimension_semantics = [#tpu.dimension_semantics<parallel>, #tpu.dimension_semantics<arbitrary>], iteration_bounds = array<i64: 2, 2>, scalar_prefetch = 0 : i64, scratch_operands = 4 : i64, tpu.core_type = #tpu.core_type<tc>, window_params = [{transform_indices = @transform_0, window_bounds = array<i64: 8, 8, 512>}, {transform_indices = @transform_1, window_bounds = array<i64: 8, 512>}, {transform_indices = @transform_2, window_bounds = array<i64: 8, 512>}, {transform_indices = @transform_3, window_bounds = array<i64: 8, 1>}, {transform_indices = @transform_4, window_bounds = array<i64: 8, 1>}, {transform_indices = @transform_5, window_bounds = array<i64: 8, 1>}]} {
    %c0_i32 = arith.constant 0 : i32
    %0 = arith.cmpi eq, %arg1, %c0_i32 : i32
    %1 = arith.extui %0 : i1 to i32
    %c0_i32_0 = arith.constant 0 : i32
    %2 = arith.cmpi ne, %1, %c0_i32_0 : i32
    scf.if %2 {
      %cst_27 = arith.constant 0.000000e+00 : f32
      %46 = vector.broadcast %cst_27 : f32 to vector<8x8xf32>
      %c0_28 = arith.constant 0 : index
      %c0_29 = arith.constant 0 : index
      %47 = vector.load %arg8[%c0_28, %c0_29] : memref<8x8xf32, #tpu.memory_space<vmem>>, vector<8x8xf32>
      tpu.vector_store %arg8[%c0_28, %c0_29], %46 {strides = array<i32>} : memref<8x8xf32, #tpu.memory_space<vmem>>, vector<8x8xf32>,
      %cst_30 = arith.constant 0.000000e+00 : f32
      %48 = vector.broadcast %cst_30 : f32 to vector<8x1xf32>
      %c0_31 = arith.constant 0 : index
      %c0_32 = arith.constant 0 : index
      %49 = vector.load %arg9[%c0_31, %c0_32] : memref<8x1xf32, #tpu.memory_space<vmem>>, vector<8x1xf32>
      tpu.vector_store %arg9[%c0_31, %c0_32], %48 {strides = array<i32>} : memref<8x1xf32, #tpu.memory_space<vmem>>, vector<8x1xf32>,
      %cst_33 = arith.constant 0.000000e+00 : f32
      %50 = vector.broadcast %cst_33 : f32 to vector<8x8xf32>
      %c0_34 = arith.constant 0 : index
      %c0_35 = arith.constant 0 : index
      %51 = vector.load %arg10[%c0_34, %c0_35] : memref<8x8xf32, #tpu.memory_space<vmem>>, vector<8x8xf32>
      tpu.vector_store %arg10[%c0_34, %c0_35], %50 {strides = array<i32>} : memref<8x8xf32, #tpu.memory_space<vmem>>, vector<8x8xf32>,
      %cst_36 = arith.constant 0.000000e+00 : f32
      %52 = vector.broadcast %cst_36 : f32 to vector<8x1xf32>
      %c0_37 = arith.constant 0 : index
      %c0_38 = arith.constant 0 : index
      %53 = vector.load %arg11[%c0_37, %c0_38] : memref<8x1xf32, #tpu.memory_space<vmem>>, vector<8x1xf32>
      tpu.vector_store %arg11[%c0_37, %c0_38], %52 {strides = array<i32>} : memref<8x1xf32, #tpu.memory_space<vmem>>, vector<8x1xf32>,
    } else {
    }
    %c0 = arith.constant 0 : index
    %c0_1 = arith.constant 0 : index
    %c0_2 = arith.constant 0 : index
    %3 = vector.load %arg2[%c0, %c0_1, %c0_2] : memref<8x8x512xbf16, #tpu.memory_space<vmem>>, vector<8x8x512xbf16>
    %c0_3 = arith.constant 0 : index
    %c0_4 = arith.constant 0 : index
    %4 = vector.load %arg3[%c0_3, %c0_4] : memref<8x512xbf16, #tpu.memory_space<vmem>>, vector<8x512xbf16>
    %c0_5 = arith.constant 0 : index
    %c0_6 = arith.constant 0 : index
    %5 = vector.load %arg4[%c0_5, %c0_6] : memref<8x512xi32, #tpu.memory_space<vmem>>, vector<8x512xi32>
    %c0_7 = arith.constant 0 : index
    %c0_8 = arith.constant 0 : index
    %6 = vector.load %arg8[%c0_7, %c0_8] : memref<8x8xf32, #tpu.memory_space<vmem>>, vector<8x8xf32>
    %7 = vector.shape_cast %4 : vector<8x512xbf16> to vector<8x1x512xbf16>
    %8 = vector.broadcast %7 : vector<8x1x512xbf16> to vector<8x8x512xbf16>
    %9 = arith.mulf %3, %8 : vector<8x8x512xbf16>
    %10 = arith.extf %9 : vector<8x8x512xbf16> to vector<8x8x512xf32>
    %cst = arith.constant dense<0.000000e+00> : vector<8x8xf32>
    %11 = vector.multi_reduction <add>, %10, %cst [2] : vector<8x8x512xf32> to vector<8x8xf32>
    %12 = arith.addf %6, %11 : vector<8x8xf32>
    %c0_9 = arith.constant 0 : index
    %c0_10 = arith.constant 0 : index
    %13 = vector.load %arg8[%c0_9, %c0_10] : memref<8x8xf32, #tpu.memory_space<vmem>>, vector<8x8xf32>
    tpu.vector_store %arg8[%c0_9, %c0_10], %12 {strides = array<i32>} : memref<8x8xf32, #tpu.memory_space<vmem>>, vector<8x8xf32>,
    %c0_11 = arith.constant 0 : index
    %c0_12 = arith.constant 0 : index
    %14 = vector.load %arg9[%c0_11, %c0_12] : memref<8x1xf32, #tpu.memory_space<vmem>>, vector<8x1xf32>
    %15 = arith.extf %4 : vector<8x512xbf16> to vector<8x512xf32>
    %cst_13 = arith.constant dense<0.000000e+00> : vector<8xf32>
    %16 = vector.multi_reduction <add>, %15, %cst_13 [1] : vector<8x512xf32> to vector<8xf32>
    %17 = vector.shape_cast %16 : vector<8xf32> to vector<8x1xf32>
    %18 = arith.addf %14, %17 : vector<8x1xf32>
    %c0_14 = arith.constant 0 : index
    %c0_15 = arith.constant 0 : index
    %19 = vector.load %arg9[%c0_14, %c0_15] : memref<8x1xf32, #tpu.memory_space<vmem>>, vector<8x1xf32>
    tpu.vector_store %arg9[%c0_14, %c0_15], %18 {strides = array<i32>} : memref<8x1xf32, #tpu.memory_space<vmem>>, vector<8x1xf32>,
    %c-100_i32 = arith.constant -100 : i32
    %20 = vector.broadcast %c-100_i32 : i32 to vector<8x512xi32>
    %21 = arith.cmpi ne, %5, %20 : vector<8x512xi32>
    %22 = tpu.iota {dimensions = array<i32: 1>} : vector<1x8x512xi32>
    %23 = vector.shape_cast %5 : vector<8x512xi32> to vector<8x1x512xi32>
    %24 = vector.broadcast %23 : vector<8x1x512xi32> to vector<8x8x512xi32>
    %25 = vector.broadcast %22 : vector<1x8x512xi32> to vector<8x8x512xi32>
    %26 = arith.cmpi eq, %24, %25 : vector<8x8x512xi32>
    %27 = vector.shape_cast %21 : vector<8x512xi1> to vector<8x1x512xi1>
    %28 = vector.broadcast %27 : vector<8x1x512xi1> to vector<8x8x512xi1>
    %29 = arith.andi %26, %28 : vector<8x8x512xi1>
    %c0_16 = arith.constant 0 : index
    %c0_17 = arith.constant 0 : index
    %30 = vector.load %arg10[%c0_16, %c0_17] : memref<8x8xf32, #tpu.memory_space<vmem>>, vector<8x8xf32>
    %31 = arith.extui %29 : vector<8x8x512xi1> to vector<8x8x512xi32>
    %32 = arith.sitofp %31 : vector<8x8x512xi32> to vector<8x8x512xf32>
    %cst_18 = arith.constant dense<0.000000e+00> : vector<8x8xf32>
    %33 = vector.multi_reduction <add>, %32, %cst_18 [2] : vector<8x8x512xf32> to vector<8x8xf32>
    %34 = arith.addf %30, %33 : vector<8x8xf32>
    %c0_19 = arith.constant 0 : index
    %c0_20 = arith.constant 0 : index
    %35 = vector.load %arg10[%c0_19, %c0_20] : memref<8x8xf32, #tpu.memory_space<vmem>>, vector<8x8xf32>
    tpu.vector_store %arg10[%c0_19, %c0_20], %34 {strides = array<i32>} : memref<8x8xf32, #tpu.memory_space<vmem>>, vector<8x8xf32>,
    %c0_21 = arith.constant 0 : index
    %c0_22 = arith.constant 0 : index
    %36 = vector.load %arg11[%c0_21, %c0_22] : memref<8x1xf32, #tpu.memory_space<vmem>>, vector<8x1xf32>
    %37 = arith.extui %21 : vector<8x512xi1> to vector<8x512xi32>
    %38 = arith.sitofp %37 : vector<8x512xi32> to vector<8x512xf32>
    %cst_23 = arith.constant dense<0.000000e+00> : vector<8xf32>
    %39 = vector.multi_reduction <add>, %38, %cst_23 [1] : vector<8x512xf32> to vector<8xf32>
    %40 = vector.shape_cast %39 : vector<8xf32> to vector<8x1xf32>
    %41 = arith.addf %36, %40 : vector<8x1xf32>
    %c0_24 = arith.constant 0 : index
    %c0_25 = arith.constant 0 : index
    %42 = vector.load %arg11[%c0_24, %c0_25] : memref<8x1xf32, #tpu.memory_space<vmem>>, vector<8x1xf32>
    tpu.vector_store %arg11[%c0_24, %c0_25], %41 {strides = array<i32>} : memref<8x1xf32, #tpu.memory_space<vmem>>, vector<8x1xf32>,
    %c1_i32 = arith.constant 1 : i32
    %43 = arith.cmpi eq, %arg1, %c1_i32 : i32
    %44 = arith.extui %43 : i1 to i32
    %c0_i32_26 = arith.constant 0 : i32
    %45 = arith.cmpi ne, %44, %c0_i32_26 : i32
    scf.if %45 {
      %c0_27 = arith.constant 0 : index
      %c0_28 = arith.constant 0 : index
      %46 = vector.load %arg8[%c0_27, %c0_28] : memref<8x8xf32, #tpu.memory_space<vmem>>, vector<8x8xf32>
      %c0_29 = arith.constant 0 : index
      %c0_30 = arith.constant 0 : index
      %47 = vector.load %arg9[%c0_29, %c0_30] : memref<8x1xf32, #tpu.memory_space<vmem>>, vector<8x1xf32>
      %cst_31 = arith.constant 1.000000e-10 : f32
      %48 = vector.broadcast %cst_31 : f32 to vector<8x1xf32>
      %49 = arith.addf %47, %48 : vector<8x1xf32>
      %50 = vector.broadcast %49 : vector<8x1xf32> to vector<8x8xf32>
      %51 = arith.divf %46, %50 : vector<8x8xf32>
      %c0_32 = arith.constant 0 : index
      %c0_33 = arith.constant 0 : index
      %52 = vector.load %arg10[%c0_32, %c0_33] : memref<8x8xf32, #tpu.memory_space<vmem>>, vector<8x8xf32>
      %cst_34 = arith.constant 9.765625E-4 : f32
      %53 = vector.broadcast %cst_34 : f32 to vector<8x8xf32>
      %54 = arith.mulf %52, %53 : vector<8x8xf32>
      %c0_35 = arith.constant 0 : index
      %c0_36 = arith.constant 0 : index
      %55 = vector.load %arg11[%c0_35, %c0_36] : memref<8x1xf32, #tpu.memory_space<vmem>>, vector<8x1xf32>
      %cst_37 = arith.constant 0.000000e+00 : f32
      %56 = vector.broadcast %cst_37 : f32 to vector<8x1xf32>
      %57 = arith.cmpf ogt, %55, %56 : vector<8x1xf32>
      %58 = arith.extui %57 : vector<8x1xi1> to vector<8x1xi32>
      %59 = arith.sitofp %58 : vector<8x1xi32> to vector<8x1xf32>
      %cst_38 = arith.constant dense<0xFF800000> : vector<8xf32>
      %60 = vector.multi_reduction <maximumf>, %51, %cst_38 [1] : vector<8x8xf32> to vector<8xf32>
      %61 = vector.shape_cast %60 : vector<8xf32> to vector<8x1xf32>
      %62 = vector.broadcast %61 : vector<8x1xf32> to vector<8x8xf32>
      %63 = arith.subf %51, %62 : vector<8x8xf32>
      %64 = math.exp %63 : vector<8x8xf32>
      %cst_39 = arith.constant dense<0.000000e+00> : vector<8xf32>
      %65 = vector.multi_reduction <add>, %64, %cst_39 [1] : vector<8x8xf32> to vector<8xf32>
      %66 = vector.shape_cast %65 : vector<8xf32> to vector<8x1xf32>
      %67 = math.log %66 : vector<8x1xf32>
      %68 = vector.broadcast %67 : vector<8x1xf32> to vector<8x8xf32>
      %69 = arith.subf %63, %68 : vector<8x8xf32>
      %70 = arith.mulf %54, %69 : vector<8x8xf32>
      %cst_40 = arith.constant dense<0.000000e+00> : vector<8xf32>
      %71 = vector.multi_reduction <add>, %70, %cst_40 [1] : vector<8x8xf32> to vector<8xf32>
      %72 = vector.shape_cast %71 : vector<8xf32> to vector<8x1xf32>
      %cst_41 = arith.constant 0.000000e+00 : f32
      %73 = vector.broadcast %cst_41 : f32 to vector<8x1xf32>
      %74 = arith.subf %73, %72 : vector<8x1xf32>
      %c0_42 = arith.constant 0 : index
      %c0_43 = arith.constant 0 : index
      %75 = vector.load %arg5[%c0_42, %c0_43] : memref<8x1xf32, #tpu.memory_space<vmem>>, vector<8x1xf32>
      %76 = arith.mulf %74, %59 : vector<8x1xf32>
      %cst_44 = arith.constant 1.000000e-10 : f32
      %77 = vector.broadcast %cst_44 : f32 to vector<8x1xf32>
      %78 = arith.addf %75, %77 : vector<8x1xf32>
      %79 = arith.divf %76, %78 : vector<8x1xf32>
      %c0_45 = arith.constant 0 : index
      %c0_46 = arith.constant 0 : index
      %80 = vector.load %arg6[%c0_45, %c0_46] : memref<8x1xf32, #tpu.memory_space<vmem>>, vector<8x1xf32>
      tpu.vector_store %arg6[%c0_45, %c0_46], %79 {strides = array<i32>} : memref<8x1xf32, #tpu.memory_space<vmem>>, vector<8x1xf32>,
      %c0_47 = arith.constant 0 : index
      %c0_48 = arith.constant 0 : index
      %81 = vector.load %arg7[%c0_47, %c0_48] : memref<8x1xf32, #tpu.memory_space<vmem>>, vector<8x1xf32>
      tpu.vector_store %arg7[%c0_47, %c0_48], %59 {strides = array<i32>} : memref<8x1xf32, #tpu.memory_space<vmem>>, vector<8x1xf32>,
    } else {
    }
    return
  }
  func.func @transform_0(%arg0: i32, %arg1: i32) -> (i32, i32, i32) {
    %c0_i32 = arith.constant 0 : i32
    %c0_i32_0 = arith.constant 0 : i32
    return %arg0, %c0_i32, %arg1 : i32, i32, i32
  }
  func.func @transform_1(%arg0: i32, %arg1: i32) -> (i32, i32) {
    %c0_i32 = arith.constant 0 : i32
    return %arg0, %arg1 : i32, i32
  }
  func.func @transform_2(%arg0: i32, %arg1: i32) -> (i32, i32) {
    %c0_i32 = arith.constant 0 : i32
    return %arg0, %arg1 : i32, i32
  }
  func.func @transform_3(%arg0: i32, %arg1: i32) -> (i32, i32) {
    %c0_i32 = arith.constant 0 : i32
    %c0_i32_0 = arith.constant 0 : i32
    return %arg0, %c0_i32 : i32, i32
  }
  func.func @transform_4(%arg0: i32, %arg1: i32) -> (i32, i32) {
    %c0_i32 = arith.constant 0 : i32
    %c0_i32_0 = arith.constant 0 : i32
    return %arg0, %c0_i32 : i32, i32
  }
  func.func @transform_5(%arg0: i32, %arg1: i32) -> (i32, i32) {
    %c0_i32 = arith.constant 0 : i32
    %c0_i32_0 = arith.constant 0 : i32
    return %arg0, %c0_i32 : i32, i32
  }
}

</mosaic_0001>

<llo_original>
// kernel: tpu_custom_call.1
$region0: #{tpu_custom_call.1}
  #allocation0 [shape = 'u32[]', space=smem, size = 0x4, offset = 0x4, fixed_abs, tag = 'smem constant byte address 0x4 - core index']
  #allocation1 [shape = 'u32[144,128]{1,0:T(1,128)}', space=vmem, size = 0x12000, scoped, tag = 'internal scratch']
  #allocation2 [shape = 'f32[8,8]{1,0:T(8,128)}', space=vmem, size = 0x1000, scoped, tag = 'scratch operand']
  #allocation3 [shape = 'f32[8,1]{1,0:T(8,128)}', space=vmem, size = 0x1000, scoped, tag = 'scratch operand']
  #allocation4 [shape = 'f32[8,8]{1,0:T(8,128)}', space=vmem, size = 0x1000, scoped, tag = 'scratch operand']
  #allocation5 [shape = 'f32[8,1]{1,0:T(8,128)}', space=vmem, size = 0x1000, scoped, tag = 'scratch operand']
  %s0 = inlined_call_operand.hbm [shape: bf16[16,8,1024], index: 0, kind: input, shape index: {}]
  %s1 = inlined_call_operand.hbm [shape: bf16[16,1024], index: 1, kind: input, shape index: {}]
  %s2 = inlined_call_operand.hbm [shape: s32[16,1024], index: 2, kind: input, shape index: {}]
  %s3 = inlined_call_operand.vmem [shape: f32[16,1], index: 3, kind: input, shape index: {}]
  %s4 = inlined_call_operand.vmem [shape: f32[16,1], index: 4, kind: output, shape index: {0}]
  %s5 = inlined_call_operand.vmem [shape: f32[16,1], index: 5, kind: output, shape index: {1}]
  %6 = xla_tuple %s4, %s5
  %s7 = sld [smem:[#allocation0]]
  $region77: #{tpu_custom_call.1} parent=0
    _
  %s9 = ssub.s32 1, %s7
  %s10 = scalar_select 0, %s9, %s7
  $region1: #{tpu_custom_call.1} parent=0
    #allocation6 [shape = 'u8[131072]{0}', space=vmem, size = 0x20000, scoped, tag = 'input window, operand 0']
    #allocation7 [shape = 's32[2]{0}', space=sflag, size = 0x8, scoped, tag = 'scoped memory for tpu_custom_call.1']
    #allocation8 [shape = 'u8[16384]{0}', space=vmem, size = 0x4000, scoped, tag = 'input window, operand 1']
    #allocation9 [shape = 's32[2]{0}', space=sflag, size = 0x8, scoped, tag = 'scoped memory for tpu_custom_call.1']
    #allocation10 [shape = 'u8[32768]{0}', space=vmem, size = 0x8000, scoped, tag = 'input window, operand 2']
    %11 = vsyncpa [#allocation7], 0
    %s12 = scalar_lea.sflag [#allocation7], 1
    %13 = vsyncpa %s12, 0
    %14 = vsyncpa [#allocation9], 0
    %s15 = scalar_lea.sflag [#allocation9], 1
    %16 = vsyncpa %s15, 0
    loop: start=0, step=1, limit=6
    $region2: #{tpu_custom_call.1} parent=1 // loop_pre_header
      _
    $region3: #{tpu_custom_call.1} parent=1 // loop_header
      %s18 = sphi 0, %s22
      %p19 = scmp.ge.s32.totalorder %s18, 6
      %s25 = sphi 0, %s37
      %s26 = sphi 0, %s33
      %s27 = sphi 0, %s25
      %s28 = sphi 0, %s26
      %s29 = sphi 0, %s27
      %s30 = sphi 0, %s28
      %s42 = sphi 0, %s44
      %s45 = sphi 0, %s42
      %s46 = sphi 0, %s45
      %s62 = sphi 0, %s46
      %s70 = sphi 0, %s72
      %s73 = sphi 0, %s70
      %s74 = sphi 0, %s73
      %s90 = sphi 0, %s74
      %s98 = sphi 0, %s100
      %s101 = sphi 0, %s98
      %s102 = sphi 0, %s101
      %s118 = sphi 0, %s102
      %s124 = sphi 0, %s126
      %s127 = sphi 0, %s124
      %s128 = sphi 0, %s127
      %s144 = sphi 0, %s128
      %s150 = sphi 0, %s152
      %s153 = sphi 0, %s150
      %s154 = sphi 0, %s153
      %s170 = sphi 0, %s154
      %s176 = sphi 0, %s178
      %s179 = sphi 0, %s176
      %s180 = sphi 0, %s179
      %s196 = sphi 0, %s180
    $region4: #{tpu_custom_call.1} parent=1 // loop_header_branch
      %21 = sbr.rel (%p19) target = $region8
    $region5: #{tpu_custom_call.1} parent=1 // loop_body
      %s23 = ssub.s32 %s18, 1
      %s24 = ssub.s32 %s18, 2
      %s31 = sadd.s32 1, %s26
      %p32 = scmp.ge.s32.totalorder %s31, 2
      %s33 = scalar_select %p32, 0, %s31
      %s34 = sadd.s32 1, %s25
      %s35 = scalar_select %p32, %s34, %s25
      %p36 = scmp.ge.s32.totalorder %s35, 2
      %s37 = scalar_select %p36, 0, %s35
      %s38 = ssub.s32 %s25, %s37
      %s39 = ssub.s32 %s26, %s33
      %s40 = sor.u32 %s38, %s39
      %p41 = scmp.eq.s32.totalorder %s40, 0
      %s43 = sadd.s32 %s42, 1
      %s44 = scalar_select %p41, %s42, %s43
      %p47 = pneg %p41
      %p48 = scmp.eq.s32.totalorder %s18, 3
      %p49 = por %p47, %p48
      %p50 = scmp.ne.s32.totalorder %s42, %s45
      %p51 = scmp.eq.s32.totalorder %s18, 0
      %p52 = por %p50, %p51
      %p53 = scmp.ne.s32.totalorder %s42, %s45
      %p54 = scmp.eq.s32.totalorder %s23, 3
      %p55 = por %p53, %p54
      %p56 = scmp.ne.s32.totalorder %s45, %s46
      %p57 = scmp.eq.s32.totalorder %s23, 0
      %p58 = por %p56, %p57
      %p59 = scmp.ne.s32.totalorder %s45, %s46
      %p60 = scmp.eq.s32.totalorder %s24, 3
      %p61 = por %p59, %p60
      %p63 = scmp.ne.s32.totalorder %s46, %s62
      %p64 = scmp.eq.s32.totalorder %s24, 0
      %p65 = por %p63, %p64
      %s66 = ssub.s32 %s25, %s37
      %s67 = ssub.s32 %s26, %s33
      %s68 = sor.u32 %s66, %s67
      %p69 = scmp.eq.s32.totalorder %s68, 0
      %s71 = sadd.s32 %s70, 1
      %s72 = scalar_select %p69, %s70, %s71
      %p75 = pneg %p69
      %p76 = scmp.eq.s32.totalorder %s18, 3
      %p77 = por %p75, %p76
      %p78 = scmp.ne.s32.totalorder %s70, %s73
      %p79 = scmp.eq.s32.totalorder %s18, 0
      %p80 = por %p78, %p79
      %p81 = scmp.ne.s32.totalorder %s70, %s73
      %p82 = scmp.eq.s32.totalorder %s23, 3
      %p83 = por %p81, %p82
      %p84 = scmp.ne.s32.totalorder %s73, %s74
      %p85 = scmp.eq.s32.totalorder %s23, 0
      %p86 = por %p84, %p85
      %p87 = scmp.ne.s32.totalorder %s73, %s74
      %p88 = scmp.eq.s32.totalorder %s24, 3
      %p89 = por %p87, %p88
      %p91 = scmp.ne.s32.totalorder %s74, %s90
      %p92 = scmp.eq.s32.totalorder %s24, 0
      %p93 = por %p91, %p92
      %s94 = ssub.s32 %s25, %s37
      %s95 = ssub.s32 %s26, %s33
      %s96 = sor.u32 %s94, %s95
      %p97 = scmp.eq.s32.totalorder %s96, 0
      %s99 = sadd.s32 %s98, 1
      %s100 = scalar_select %p97, %s98, %s99
      %p103 = pneg %p97
      %p104 = scmp.eq.s32.totalorder %s18, 3
      %p105 = por %p103, %p104
      %p106 = scmp.ne.s32.totalorder %s98, %s101
      %p107 = scmp.eq.s32.totalorder %s18, 0
      %p108 = por %p106, %p107
      %p109 = scmp.ne.s32.totalorder %s98, %s101
      %p110 = scmp.eq.s32.totalorder %s23, 3
      %p111 = por %p109, %p110
      %p112 = scmp.ne.s32.totalorder %s101, %s102
      %p113 = scmp.eq.s32.totalorder %s23, 0
      %p114 = por %p112, %p113
      %p115 = scmp.ne.s32.totalorder %s101, %s102
      %p116 = scmp.eq.s32.totalorder %s24, 3
      %p117 = por %p115, %p116
      %p119 = scmp.ne.s32.totalorder %s102, %s118
      %p120 = scmp.eq.s32.totalorder %s24, 0
      %p121 = por %p119, %p120
      %s122 = ssub.s32 %s25, %s37
      %p123 = scmp.eq.s32.totalorder %s122, 0
      %s125 = sadd.s32 %s124, 1
      %s126 = scalar_select %p123, %s124, %s125
      %p129 = pneg %p123
      %p130 = scmp.eq.s32.totalorder %s18, 3
      %p131 = por %p129, %p130
      %p132 = scmp.ne.s32.totalorder %s124, %s127
      %p133 = scmp.eq.s32.totalorder %s18, 0
      %p134 = por %p132, %p133
      %p135 = scmp.ne.s32.totalorder %s124, %s127
      %p136 = scmp.eq.s32.totalorder %s23, 3
      %p137 = por %p135, %p136
      %p138 = scmp.ne.s32.totalorder %s127, %s128
      %p139 = scmp.eq.s32.totalorder %s23, 0
      %p140 = por %p138, %p139
      %p141 = scmp.ne.s32.totalorder %s127, %s128
      %p142 = scmp.eq.s32.totalorder %s24, 3
      %p143 = por %p141, %p142
      %p145 = scmp.ne.s32.totalorder %s128, %s144
      %p146 = scmp.eq.s32.totalorder %s24, 0
      %p147 = por %p145, %p146
      %s148 = ssub.s32 %s25, %s37
      %p149 = scmp.eq.s32.totalorder %s148, 0
      %s151 = sadd.s32 %s150, 1
      %s152 = scalar_select %p149, %s150, %s151
      %p155 = pneg %p149
      %p156 = scmp.eq.s32.totalorder %s18, 3
      %p157 = por %p155, %p156
      %p158 = scmp.ne.s32.totalorder %s150, %s153
      %p159 = scmp.eq.s32.totalorder %s18, 0
      %p160 = por %p158, %p159
      %p161 = scmp.ne.s32.totalorder %s150, %s153
      %p162 = scmp.eq.s32.totalorder %s23, 3
      %p163 = por %p161, %p162
      %p164 = scmp.ne.s32.totalorder %s153, %s154
      %p165 = scmp.eq.s32.totalorder %s23, 0
      %p166 = por %p164, %p165
      %p167 = scmp.ne.s32.totalorder %s153, %s154
      %p168 = scmp.eq.s32.totalorder %s24, 3
      %p169 = por %p167, %p168
      %p171 = scmp.ne.s32.totalorder %s154, %s170
      %p172 = scmp.eq.s32.totalorder %s24, 0
      %p173 = por %p171, %p172
      %s174 = ssub.s32 %s25, %s37
      %p175 = scmp.eq.s32.totalorder %s174, 0
      %s177 = sadd.s32 %s176, 1
      %s178 = scalar_select %p175, %s176, %s177
      %p181 = pneg %p175
      %p182 = scmp.eq.s32.totalorder %s18, 3
      %p183 = por %p181, %p182
      %p184 = scmp.ne.s32.totalorder %s176, %s179
      %p185 = scmp.eq.s32.totalorder %s18, 0
      %p186 = por %p184, %p185
      %p187 = scmp.ne.s32.totalorder %s176, %s179
      %p188 = scmp.eq.s32.totalorder %s23, 3
      %p189 = por %p187, %p188
      %p190 = scmp.ne.s32.totalorder %s179, %s180
      %p191 = scmp.eq.s32.totalorder %s23, 0
      %p192 = por %p190, %p191
      %p193 = scmp.ne.s32.totalorder %s179, %s180
      %p194 = scmp.eq.s32.totalorder %s24, 3
      %p195 = por %p193, %p194
      %p197 = scmp.ne.s32.totalorder %s180, %s196
      %p198 = scmp.eq.s32.totalorder %s24, 0
      %p199 = por %p197, %p198
      %p200 = scmp.le.s32.totalorder 1, %s18
      %p201 = scmp.lt.s32.totalorder %s18, 5
      %p202 = pnand %p200, %p201
      %p203 = pneg %p202
      // Predicated region
      $region9: #{tpu_custom_call.1} parent=5 // pred_check
        _
      $region10: #{tpu_custom_call.1} parent=5 // pred_check_branch
        %205 = sbr.rel (%p202) target = $region12
      $region11: #{tpu_custom_call.1} parent=5 // pred_region
        %s206 = ssub.s32 %s18, 1
      $region12: #{tpu_custom_call.1} parent=5 // pred_fallthru
        _
      %p207 = scmp.lt.s32.totalorder %s18, 4
      // Predicated region
      $region13: #{tpu_custom_call.1} parent=5 // pred_check
        %p208 = pneg %p207
      $region14: #{tpu_custom_call.1} parent=5 // pred_check_branch
        %210 = sbr.rel (%p208) target = $region16
      $region15: #{tpu_custom_call.1} parent=5 // pred_region
        // Predicated region
        $region17: #{tpu_custom_call.1} parent=15 // pred_check
          %p211 = pneg %p52
        $region18: #{tpu_custom_call.1} parent=15 // pred_check_branch
          %213 = sbr.rel (%p211) target = $region20
        $region19: #{tpu_custom_call.1} parent=15 // pred_region
          %s214 = sand.u32 %s42, 1
          %s215 = scalar_lea.sflag [#allocation7], %s214
          %s216 = sand.u32 %s42, 1
          %s217 = smul.addr %s216, 128
          %s218 = scalar_lea.vmem [#allocation6], %s217
          %s219 = smul.u32 8, %s25
          %s220 = smul.u32 4, %s26
          %s222 = ssub.s32 2048, 2048
          %223 = vsyncadd %s215, %s222
          %s224 = smul.addr %s219, 8
          %s225 = sadd.s32 %s220, %s224
          %s226 = smul.addr %s225, 64
          %s227 = scalar_lea.hbm %s0, %s226
          %s228 = sshll.u32 %s218, 4
          %s229 = int_to_ptr.vmem [resolvable:$true] %s228
          %234 = dma.hbm_to_vmem [thread:$0]  %s227, 2048, %s229, %s215, 512, 256, 16
        $region20: #{tpu_custom_call.1} parent=15 // pred_fallthru
          _
        // Predicated region
        $region21: #{tpu_custom_call.1} parent=15 // pred_check
          %p235 = pneg %p80
        $region22: #{tpu_custom_call.1} parent=15 // pred_check_branch
          %237 = sbr.rel (%p235) target = $region24
        $region23: #{tpu_custom_call.1} parent=15 // pred_region
          %s238 = sand.u32 %s18, 1
          %s239 = scalar_lea.sflag [#allocation9], %s238
          %s240 = sand.u32 %s70, 1
          %s241 = smul.addr %s240, 16
          %s242 = scalar_lea.vmem [#allocation8], %s241
          %s243 = smul.u32 4, %s26
          %s245 = ssub.s32 256, 256
          %246 = vsyncadd %s239, %s245
          %s247 = smul.addr %s25, 8
          %s248 = sadd.s32 %s243, %s247
          %s249 = smul.addr %s248, 64
          %s250 = scalar_lea.hbm %s1, %s249
          %s252 = sshll.u32 %s242, 4
          %s253 = int_to_ptr.vmem [resolvable:$true] %s252
          %255 = dma.hbm_to_vmem [thread:$0]  %s250, 256, %s253, %s239
        $region24: #{tpu_custom_call.1} parent=15 // pred_fallthru
          _
        // Predicated region
        $region25: #{tpu_custom_call.1} parent=15 // pred_check
          %p256 = pneg %p108
        $region26: #{tpu_custom_call.1} parent=15 // pred_check_branch
          %258 = sbr.rel (%p256) target = $region28
        $region27: #{tpu_custom_call.1} parent=15 // pred_region
          %s259 = sand.u32 %s18, 1
          %s260 = scalar_lea.sflag [#allocation9], %s259
          %s261 = sand.u32 %s98, 1
          %s262 = smul.addr %s261, 32
          %s263 = scalar_lea.vmem [#allocation10], %s262
          %s264 = smul.u32 4, %s26
          %s266 = ssub.s32 512, 512
          %267 = vsyncadd %s260, %s266
          %s268 = smul.addr %s25, 8
          %s269 = sadd.s32 %s264, %s268
          %s270 = smul.addr %s269, 128
          %s271 = scalar_lea.hbm %s2, %s270
          %s273 = sshll.u32 %s263, 4
          %s274 = int_to_ptr.vmem [resolvable:$true] %s273
          %276 = dma.hbm_to_vmem [thread:$0]  %s271, 512, %s274, %s260
        $region28: #{tpu_custom_call.1} parent=15 // pred_fallthru
          _
        // Predicated region
        $region29: #{tpu_custom_call.1} parent=15 // pred_check
          %p277 = pneg %p134
        $region30: #{tpu_custom_call.1} parent=15 // pred_check_branch
          %279 = sbr.rel (%p277) target = $region32
        $region31: #{tpu_custom_call.1} parent=15 // pred_region
          %p280 = scmp.lt.s32.totalorder %s25, 1
          %s281 = scalar_select %p280, %s25, 1
          %s282 = smul.addr %s281, 8
          %s283 = scalar_lea.vmem %s3, %s282
        $region32: #{tpu_custom_call.1} parent=15 // pred_fallthru
          _
      $region16: #{tpu_custom_call.1} parent=5 // pred_fallthru
        _
      %p284 = scmp.le.s32.totalorder 1, %s18
      %p285 = scmp.lt.s32.totalorder %s18, 5
      %p286 = pnand %p284, %p285
      %p287 = pneg %p286
      // Predicated region
      $region33: #{tpu_custom_call.1} parent=5 // pred_check
        _
      $region34: #{tpu_custom_call.1} parent=5 // pred_check_branch
        %289 = sbr.rel (%p286) target = $region36
      $region35: #{tpu_custom_call.1} parent=5 // pred_region
        %s290 = ssub.s32 %s18, 1
        %s291 = sand.u32 %s45, 1
        %s292 = scalar_lea.sflag [#allocation7], %s291
        %s293 = sand.u32 %s45, 1
        %s294 = smul.addr %s293, 128
        %s295 = scalar_lea.vmem [#allocation6], %s294
        // Predicated region
        $region37: #{tpu_custom_call.1} parent=35 // pred_check
          %p296 = pneg %p58
        $region38: #{tpu_custom_call.1} parent=35 // pred_check_branch
          %298 = sbr.rel (%p296) target = $region40
        $region39: #{tpu_custom_call.1} parent=35 // pred_region
          %299 = dma.done %s292, 2048
        $region40: #{tpu_custom_call.1} parent=35 // pred_fallthru
          _
        %s300 = sand.u32 %s23, 1
        %s301 = scalar_lea.sflag [#allocation9], %s300
        %s302 = sand.u32 %s73, 1
        %s303 = smul.addr %s302, 16
        %s304 = scalar_lea.vmem [#allocation8], %s303
        // Predicated region
        $region41: #{tpu_custom_call.1} parent=35 // pred_check
          %p305 = pneg %p86
        $region42: #{tpu_custom_call.1} parent=35 // pred_check_branch
          %307 = sbr.rel (%p305) target = $region44
        $region43: #{tpu_custom_call.1} parent=35 // pred_region
          %308 = dma.done %s301, 256
        $region44: #{tpu_custom_call.1} parent=35 // pred_fallthru
          _
        %s309 = sand.u32 %s23, 1
        %s310 = scalar_lea.sflag [#allocation9], %s309
        %s311 = sand.u32 %s101, 1
        %s312 = smul.addr %s311, 32
        %s313 = scalar_lea.vmem [#allocation10], %s312
        // Predicated region
        $region45: #{tpu_custom_call.1} parent=35 // pred_check
          %p314 = pneg %p114
        $region46: #{tpu_custom_call.1} parent=35 // pred_check_branch
          %316 = sbr.rel (%p314) target = $region48
        $region47: #{tpu_custom_call.1} parent=35 // pred_region
          %317 = dma.done %s310, 512
        $region48: #{tpu_custom_call.1} parent=35 // pred_fallthru
          _
        %s318 = sand.u32 %s45, 1
        %s319 = scalar_lea.sflag [#allocation7], %s318
        %s320 = sand.u32 %s45, 1
        %s321 = smul.addr %s320, 128
        %s322 = scalar_lea.vmem [#allocation6], %s321
        %p323 = pneg %p58
        %p324 = pneg %p55
        %s325 = sand.u32 %s23, 1
        %s326 = scalar_lea.sflag [#allocation9], %s325
        %s327 = sand.u32 %s73, 1
        %s328 = smul.addr %s327, 16
        %s329 = scalar_lea.vmem [#allocation8], %s328
        %p330 = pneg %p86
        %p331 = pneg %p83
        %s332 = sand.u32 %s23, 1
        %s333 = scalar_lea.sflag [#allocation9], %s332
        %s334 = sand.u32 %s101, 1
        %s335 = smul.addr %s334, 32
        %s336 = scalar_lea.vmem [#allocation10], %s335
        %p337 = pneg %p114
        %p338 = pneg %p111
        %p339 = scmp.lt.s32.totalorder %s27, 1
        %s340 = scalar_select %p339, %s27, 1
        %s341 = smul.addr %s340, 8
        %s342 = scalar_lea.vmem %s3, %s341
        %p343 = pneg %p140
        %p344 = pneg %p137
        %p345 = pneg %p166
        %p346 = pneg %p163
        %p347 = scmp.lt.s32.totalorder %s27, 1
        %s348 = scalar_select %p347, %s27, 1
        %s349 = smul.addr %s348, 8
        %s350 = scalar_lea.vmem %s4, %s349
        %p351 = pneg %p192
        %p352 = pneg %p189
        %p353 = scmp.lt.s32.totalorder %s27, 1
        %s354 = scalar_select %p353, %s27, 1
        %s355 = smul.addr %s354, 8
        %s356 = scalar_lea.vmem %s5, %s355
        %s357 = smul.u32 8, %s27
        %s358 = smul.u32 4, %s28
        %s359 = smul.u32 4, %s28
        %s360 = smul.u32 4, %s28
        %p361 = scmp.lt.s32.totalorder %s27, 1
        %s362 = scalar_select %p361, %s27, 1
        %s363 = smul.addr %s362, 8
        %s364 = scalar_lea.vmem %s3, %s363
        %p365 = scmp.lt.s32.totalorder %s27, 1
        %s366 = scalar_select %p365, %s27, 1
        %s367 = smul.addr %s366, 8
        %s368 = scalar_lea.vmem %s4, %s367
        %p369 = scmp.lt.s32.totalorder %s27, 1
        %s370 = scalar_select %p369, %s27, 1
        %s371 = smul.addr %s370, 8
        %s372 = scalar_lea.vmem %s5, %s371
        %p373 = scmp.eq.s32.totalorder %s28, 0
        // Predicated region
        $region49: #{tpu_custom_call.1} parent=35 // pred_check
          %p374 = pneg %p373
        $region50: #{tpu_custom_call.1} parent=35 // pred_check_branch
          %376 = sbr.rel (%p374) target = $region52
        $region51: #{tpu_custom_call.1} parent=35 // pred_region
          %vm377 = vcmask 64512
          %378 = vst.msk [vmem:[#allocation2] sm:$0xff] %vm377, 0.0
          %vm379 = vcmask 7168
          %380 = vst.msk [vmem:[#allocation3] sm:$0xff] %vm379, 0.0
          %381 = vst.msk [vmem:[#allocation4] sm:$0xff] %vm377, 0.0
          %382 = vst.msk [vmem:[#allocation5] sm:$0xff] %vm379, 0.0
        $region52: #{tpu_custom_call.1} parent=35 // pred_fallthru
          _
        %v383 = vld [vmem:[%s295] sm:$0xff]
        %v384 = vld [vmem:[%s295 + $0x8] sm:$0xff]
        %v385 = vld [vmem:[%s295 + $0x10] sm:$0xff]
        %v386 = vld [vmem:[%s295 + $0x18] sm:$0xff]
        %v387 = vld [vmem:[%s295 + $0x20] sm:$0xff]
        %v388 = vld [vmem:[%s295 + $0x28] sm:$0xff]
        %v389 = vld [vmem:[%s295 + $0x30] sm:$0xff]
        %v390 = vld [vmem:[%s295 + $0x38] sm:$0xff]
        %v391 = vld [vmem:[%s295 + $0x40] sm:$0xff]
        %v392 = vld [vmem:[%s295 + $0x48] sm:$0xff]
        %v393 = vld [vmem:[%s295 + $0x50] sm:$0xff]
        %v394 = vld [vmem:[%s295 + $0x58] sm:$0xff]
        %v395 = vld [vmem:[%s295 + $0x60] sm:$0xff]
        %v396 = vld [vmem:[%s295 + $0x68] sm:$0xff]
        %v397 = vld [vmem:[%s295 + $0x70] sm:$0xff]
        %v398 = vld [vmem:[%s295 + $0x78] sm:$0xff]
        %v399 = vld [vmem:[%s304] sm:$0xff]
        %v400 = vld [vmem:[%s304 + $0x8] sm:$0xff]
        %v401 = vld [vmem:[%s313] sm:$0xff]
        %v402 = vld [vmem:[%s313 + $0x8] sm:$0xff]
        %v403 = vld [vmem:[%s313 + $0x10] sm:$0xff]
        %v404 = vld [vmem:[%s313 + $0x18] sm:$0xff]
        %v405 = vld [vmem:[#allocation2] sm:$0xff]
        %v409 = vunpack.c.l.s4 1966171168
        %v410 = vunpack.c.0.s8 %v409
        %v411 = vlaneseq
        %v412 = vshrl.u32 %v411, 7
        %v413 = vsub.s32 %v410, %v412
        %v414 = vrot.slane %v399, %v413
        %v416 = vunpack.c.l.s4 1966171168
        %v417 = vunpack.c.0.s8 %v416
        %v418 = vlaneseq
        %v419 = vshrl.u32 %v418, 7
        %v420 = vsub.s32 %v417, %v419
        %v421 = vrot.slane %v400, %v420
        %v422 = vcombine.low %v414, %v421
        %v423 = vcombine.high %v414, %v421
        %v425 = vunpack.c.l.s4 1966171168
        %v426 = vunpack.c.0.s8 %v425
        %v427 = vlaneseq
        %v428 = vshrl.u32 %v427, 7
        %v429 = vsub.s32 %v426, %v428
        %v430 = vrot.slane %v422, %v429
        %v432 = vunpack.c.l.s4 1966171168
        %v433 = vunpack.c.0.s8 %v432
        %v434 = vlaneseq
        %v435 = vshrl.u32 %v434, 7
        %v436 = vsub.s32 %v433, %v435
        %v437 = vrot.slane %v423, %v436
        %v438 = vcombine.high %v430, %v430
        %v439 = vcombine.high %v437, %v437
        %v440 = vunpack.i.l.s16 %v430
        %v441 = vunpack.i.h.s16 %v430
        %v442 = vunpack.i.l.s16 %v437
        %v443 = vunpack.i.h.s16 %v437
        %v444 = vunpack.i.l.s16 %v438
        %v445 = vunpack.i.h.s16 %v438
        %v446 = vunpack.i.l.s16 %v439
        %v447 = vunpack.i.h.s16 %v439
        %v448 = vpack.i.b16 %v440, %v440
        %v449 = vpack.i.b16 %v441, %v441
        %v450 = vpack.i.b16 %v442, %v442
        %v451 = vpack.i.b16 %v443, %v443
        %v452 = vpack.i.b16 %v444, %v444
        %v453 = vpack.i.b16 %v445, %v445
        %v454 = vpack.i.b16 %v446, %v446
        %v455 = vpack.i.b16 %v447, %v447
        %v456 = vlaneseq
        %v457 = vshrl.u32 %v456, 7
        %v458 = vsub.s32 0, %v457
        %v459 = vrot.slane %v448, %v458
        %v460 = vlaneseq
        %v461 = vshrl.u32 %v460, 7
        %v462 = vsub.s32 1, %v461
        %v463 = vrot.slane %v448, %v462
        %v464 = vlaneseq
        %v465 = vshrl.u32 %v464, 7
        %v466 = vsub.s32 2, %v465
        %v467 = vrot.slane %v448, %v466
        %v468 = vlaneseq
        %v469 = vshrl.u32 %v468, 7
        %v470 = vsub.s32 3, %v469
        %v471 = vrot.slane %v448, %v470
        %v472 = vlaneseq
        %v473 = vshrl.u32 %v472, 7
        %v474 = vsub.s32 0, %v473
        %v475 = vrot.slane %v449, %v474
        %v476 = vlaneseq
        %v477 = vshrl.u32 %v476, 7
        %v478 = vsub.s32 1, %v477
        %v479 = vrot.slane %v449, %v478
        %v480 = vlaneseq
        %v481 = vshrl.u32 %v480, 7
        %v482 = vsub.s32 2, %v481
        %v483 = vrot.slane %v449, %v482
        %v484 = vlaneseq
        %v485 = vshrl.u32 %v484, 7
        %v486 = vsub.s32 3, %v485
        %v487 = vrot.slane %v449, %v486
        %v488 = vlaneseq
        %v489 = vshrl.u32 %v488, 7
        %v490 = vsub.s32 0, %v489
        %v491 = vrot.slane %v450, %v490
        %v492 = vlaneseq
        %v493 = vshrl.u32 %v492, 7
        %v494 = vsub.s32 1, %v493
        %v495 = vrot.slane %v450, %v494
        %v496 = vlaneseq
        %v497 = vshrl.u32 %v496, 7
        %v498 = vsub.s32 2, %v497
        %v499 = vrot.slane %v450, %v498
        %v500 = vlaneseq
        %v501 = vshrl.u32 %v500, 7
        %v502 = vsub.s32 3, %v501
        %v503 = vrot.slane %v450, %v502
        %v504 = vlaneseq
        %v505 = vshrl.u32 %v504, 7
        %v506 = vsub.s32 0, %v505
        %v507 = vrot.slane %v451, %v506
        %v508 = vlaneseq
        %v509 = vshrl.u32 %v508, 7
        %v510 = vsub.s32 1, %v509
        %v511 = vrot.slane %v451, %v510
        %v512 = vlaneseq
        %v513 = vshrl.u32 %v512, 7
        %v514 = vsub.s32 2, %v513
        %v515 = vrot.slane %v451, %v514
        %v516 = vlaneseq
        %v517 = vshrl.u32 %v516, 7
        %v518 = vsub.s32 3, %v517
        %v519 = vrot.slane %v451, %v518
        %v520 = vlaneseq
        %v521 = vshrl.u32 %v520, 7
        %v522 = vsub.s32 0, %v521
        %v523 = vrot.slane %v452, %v522
        %v524 = vlaneseq
        %v525 = vshrl.u32 %v524, 7
        %v526 = vsub.s32 1, %v525
        %v527 = vrot.slane %v452, %v526
        %v528 = vlaneseq
        %v529 = vshrl.u32 %v528, 7
        %v530 = vsub.s32 2, %v529
        %v531 = vrot.slane %v452, %v530
        %v532 = vlaneseq
        %v533 = vshrl.u32 %v532, 7
        %v534 = vsub.s32 3, %v533
        %v535 = vrot.slane %v452, %v534
        %v536 = vlaneseq
        %v537 = vshrl.u32 %v536, 7
        %v538 = vsub.s32 0, %v537
        %v539 = vrot.slane %v453, %v538
        %v540 = vlaneseq
        %v541 = vshrl.u32 %v540, 7
        %v542 = vsub.s32 1, %v541
        %v543 = vrot.slane %v453, %v542
        %v544 = vlaneseq
        %v545 = vshrl.u32 %v544, 7
        %v546 = vsub.s32 2, %v545
        %v547 = vrot.slane %v453, %v546
        %v548 = vlaneseq
        %v549 = vshrl.u32 %v548, 7
        %v550 = vsub.s32 3, %v549
        %v551 = vrot.slane %v453, %v550
        %v552 = vlaneseq
        %v553 = vshrl.u32 %v552, 7
        %v554 = vsub.s32 0, %v553
        %v555 = vrot.slane %v454, %v554
        %v556 = vlaneseq
        %v557 = vshrl.u32 %v556, 7
        %v558 = vsub.s32 1, %v557
        %v559 = vrot.slane %v454, %v558
        %v560 = vlaneseq
        %v561 = vshrl.u32 %v560, 7
        %v562 = vsub.s32 2, %v561
        %v563 = vrot.slane %v454, %v562
        %v564 = vlaneseq
        %v565 = vshrl.u32 %v564, 7
        %v566 = vsub.s32 3, %v565
        %v567 = vrot.slane %v454, %v566
        %v568 = vlaneseq
        %v569 = vshrl.u32 %v568, 7
        %v570 = vsub.s32 0, %v569
        %v571 = vrot.slane %v455, %v570
        %v572 = vlaneseq
        %v573 = vshrl.u32 %v572, 7
        %v574 = vsub.s32 1, %v573
        %v575 = vrot.slane %v455, %v574
        %v576 = vlaneseq
        %v577 = vshrl.u32 %v576, 7
        %v578 = vsub.s32 2, %v577
        %v579 = vrot.slane %v455, %v578
        %v580 = vlaneseq
        %v581 = vshrl.u32 %v580, 7
        %v582 = vsub.s32 3, %v581
        %v583 = vrot.slane %v455, %v582
        %v585 = vpack.i.b16 %v459, %v459
        %v587 = vlaneseq
        %v588 = vshrl.u32 %v587, 7
        %v589 = vsub.s32 0, %v588
        %v590 = vrot.slane %v585, %v589
        %v592 = vpack.i.b16 %v463, %v463
        %v594 = vlaneseq
        %v595 = vshrl.u32 %v594, 7
        %v596 = vsub.s32 0, %v595
        %v597 = vrot.slane %v592, %v596
        %v599 = vpack.i.b16 %v467, %v467
        %v601 = vlaneseq
        %v602 = vshrl.u32 %v601, 7
        %v603 = vsub.s32 0, %v602
        %v604 = vrot.slane %v599, %v603
        %v606 = vpack.i.b16 %v471, %v471
        %v608 = vlaneseq
        %v609 = vshrl.u32 %v608, 7
        %v610 = vsub.s32 0, %v609
        %v611 = vrot.slane %v606, %v610
        %v613 = vpack.i.b16 %v475, %v475
        %v615 = vlaneseq
        %v616 = vshrl.u32 %v615, 7
        %v617 = vsub.s32 0, %v616
        %v618 = vrot.slane %v613, %v617
        %v620 = vpack.i.b16 %v479, %v479
        %v622 = vlaneseq
        %v623 = vshrl.u32 %v622, 7
        %v624 = vsub.s32 0, %v623
        %v625 = vrot.slane %v620, %v624
        %v627 = vpack.i.b16 %v483, %v483
        %v629 = vlaneseq
        %v630 = vshrl.u32 %v629, 7
        %v631 = vsub.s32 0, %v630
        %v632 = vrot.slane %v627, %v631
        %v634 = vpack.i.b16 %v487, %v487
        %v636 = vlaneseq
        %v637 = vshrl.u32 %v636, 7
        %v638 = vsub.s32 0, %v637
        %v639 = vrot.slane %v634, %v638
        %v641 = vpack.i.b16 %v491, %v491
        %v643 = vlaneseq
        %v644 = vshrl.u32 %v643, 7
        %v645 = vsub.s32 0, %v644
        %v646 = vrot.slane %v641, %v645
        %v648 = vpack.i.b16 %v495, %v495
        %v650 = vlaneseq
        %v651 = vshrl.u32 %v650, 7
        %v652 = vsub.s32 0, %v651
        %v653 = vrot.slane %v648, %v652
        %v655 = vpack.i.b16 %v499, %v499
        %v657 = vlaneseq
        %v658 = vshrl.u32 %v657, 7
        %v659 = vsub.s32 0, %v658
        %v660 = vrot.slane %v655, %v659
        %v662 = vpack.i.b16 %v503, %v503
        %v664 = vlaneseq
        %v665 = vshrl.u32 %v664, 7
        %v666 = vsub.s32 0, %v665
        %v667 = vrot.slane %v662, %v666
        %v669 = vpack.i.b16 %v507, %v507
        %v671 = vlaneseq
        %v672 = vshrl.u32 %v671, 7
        %v673 = vsub.s32 0, %v672
        %v674 = vrot.slane %v669, %v673
        %v676 = vpack.i.b16 %v511, %v511
        %v678 = vlaneseq
        %v679 = vshrl.u32 %v678, 7
        %v680 = vsub.s32 0, %v679
        %v681 = vrot.slane %v676, %v680
        %v683 = vpack.i.b16 %v515, %v515
        %v685 = vlaneseq
        %v686 = vshrl.u32 %v685, 7
        %v687 = vsub.s32 0, %v686
        %v688 = vrot.slane %v683, %v687
        %v690 = vpack.i.b16 %v519, %v519
        %v692 = vlaneseq
        %v693 = vshrl.u32 %v692, 7
        %v694 = vsub.s32 0, %v693
        %v695 = vrot.slane %v690, %v694
        %v697 = vpack.i.b16 %v523, %v523
        %v699 = vlaneseq
        %v700 = vshrl.u32 %v699, 7
        %v701 = vsub.s32 0, %v700
        %v702 = vrot.slane %v697, %v701
        %v704 = vpack.i.b16 %v527, %v527
        %v706 = vlaneseq
        %v707 = vshrl.u32 %v706, 7
        %v708 = vsub.s32 0, %v707
        %v709 = vrot.slane %v704, %v708
        %v711 = vpack.i.b16 %v531, %v531
        %v713 = vlaneseq
        %v714 = vshrl.u32 %v713, 7
        %v715 = vsub.s32 0, %v714
        %v716 = vrot.slane %v711, %v715
        %v718 = vpack.i.b16 %v535, %v535
        %v720 = vlaneseq
        %v721 = vshrl.u32 %v720, 7
        %v722 = vsub.s32 0, %v721
        %v723 = vrot.slane %v718, %v722
        %v725 = vpack.i.b16 %v539, %v539
        %v727 = vlaneseq
        %v728 = vshrl.u32 %v727, 7
        %v729 = vsub.s32 0, %v728
        %v730 = vrot.slane %v725, %v729
        %v732 = vpack.i.b16 %v543, %v543
        %v734 = vlaneseq
        %v735 = vshrl.u32 %v734, 7
        %v736 = vsub.s32 0, %v735
        %v737 = vrot.slane %v732, %v736
        %v739 = vpack.i.b16 %v547, %v547
        %v741 = vlaneseq
        %v742 = vshrl.u32 %v741, 7
        %v743 = vsub.s32 0, %v742
        %v744 = vrot.slane %v739, %v743
        %v746 = vpack.i.b16 %v551, %v551
        %v748 = vlaneseq
        %v749 = vshrl.u32 %v748, 7
        %v750 = vsub.s32 0, %v749
        %v751 = vrot.slane %v746, %v750
        %v753 = vpack.i.b16 %v555, %v555
        %v755 = vlaneseq
        %v756 = vshrl.u32 %v755, 7
        %v757 = vsub.s32 0, %v756
        %v758 = vrot.slane %v753, %v757
        %v760 = vpack.i.b16 %v559, %v559
        %v762 = vlaneseq
        %v763 = vshrl.u32 %v762, 7
        %v764 = vsub.s32 0, %v763
        %v765 = vrot.slane %v760, %v764
        %v767 = vpack.i.b16 %v563, %v563
        %v769 = vlaneseq
        %v770 = vshrl.u32 %v769, 7
        %v771 = vsub.s32 0, %v770
        %v772 = vrot.slane %v767, %v771
        %v774 = vpack.i.b16 %v567, %v567
        %v776 = vlaneseq
        %v777 = vshrl.u32 %v776, 7
        %v778 = vsub.s32 0, %v777
        %v779 = vrot.slane %v774, %v778
        %v781 = vpack.i.b16 %v571, %v571
        %v783 = vlaneseq
        %v784 = vshrl.u32 %v783, 7
        %v785 = vsub.s32 0, %v784
        %v786 = vrot.slane %v781, %v785
        %v788 = vpack.i.b16 %v575, %v575
        %v790 = vlaneseq
        %v791 = vshrl.u32 %v790, 7
        %v792 = vsub.s32 0, %v791
        %v793 = vrot.slane %v788, %v792
        %v795 = vpack.i.b16 %v579, %v579
        %v797 = vlaneseq
        %v798 = vshrl.u32 %v797, 7
        %v799 = vsub.s32 0, %v798
        %v800 = vrot.slane %v795, %v799
        %v802 = vpack.i.b16 %v583, %v583
        %v804 = vlaneseq
        %v805 = vshrl.u32 %v804, 7
        %v806 = vsub.s32 0, %v805
        %v807 = vrot.slane %v802, %v806
        %v840 = vunpack.c.l.b16 %v590
        %v841 = vunpack.c.l.b16 %v597
        %v842 = vunpack.c.l.b16 %v604
        %v843 = vunpack.c.l.b16 %v611
        %v844 = vunpack.c.l.b16 %v618
        %v845 = vunpack.c.l.b16 %v625
        %v846 = vunpack.c.l.b16 %v632
        %v847 = vunpack.c.l.b16 %v639
        %v848 = vunpack.c.l.b16 %v646
        %v849 = vunpack.c.l.b16 %v653
        %v850 = vunpack.c.l.b16 %v660
        %v851 = vunpack.c.l.b16 %v667
        %v852 = vunpack.c.l.b16 %v674
        %v853 = vunpack.c.l.b16 %v681
        %v854 = vunpack.c.l.b16 %v688
        %v855 = vunpack.c.l.b16 %v695
        %v856 = vunpack.c.l.b16 %v702
        %v857 = vunpack.c.l.b16 %v709
        %v858 = vunpack.c.l.b16 %v716
        %v859 = vunpack.c.l.b16 %v723
        %v860 = vunpack.c.l.b16 %v730
        %v861 = vunpack.c.l.b16 %v737
        %v862 = vunpack.c.l.b16 %v744
        %v863 = vunpack.c.l.b16 %v751
        %v864 = vunpack.c.l.b16 %v758
        %v865 = vunpack.c.l.b16 %v765
        %v866 = vunpack.c.l.b16 %v772
        %v867 = vunpack.c.l.b16 %v779
        %v868 = vunpack.c.l.b16 %v786
        %v869 = vunpack.c.l.b16 %v793
        %v870 = vunpack.c.l.b16 %v800
        %v871 = vunpack.c.l.b16 %v807
        %v872 = vpack.c.b16 %v841, %v840
        %v873 = vpack.c.b16 %v843, %v842
        %v874 = vpack.c.b16 %v845, %v844
        %v875 = vpack.c.b16 %v847, %v846
        %v876 = vpack.c.b16 %v849, %v848
        %v877 = vpack.c.b16 %v851, %v850
        %v878 = vpack.c.b16 %v853, %v852
        %v879 = vpack.c.b16 %v855, %v854
        %v880 = vpack.c.b16 %v857, %v856
        %v881 = vpack.c.b16 %v859, %v858
        %v882 = vpack.c.b16 %v861, %v860
        %v883 = vpack.c.b16 %v863, %v862
        %v884 = vpack.c.b16 %v865, %v864
        %v885 = vpack.c.b16 %v867, %v866
        %v886 = vpack.c.b16 %v869, %v868
        %v887 = vpack.c.b16 %v871, %v870
        %v904 = vmul.bf16 %v383, %v872
        %v905 = vmul.bf16 %v384, %v873
        %v906 = vmul.bf16 %v385, %v874
        %v907 = vmul.bf16 %v386, %v875
        %v908 = vmul.bf16 %v387, %v876
        %v909 = vmul.bf16 %v388, %v877
        %v910 = vmul.bf16 %v389, %v878
        %v911 = vmul.bf16 %v390, %v879
        %v912 = vmul.bf16 %v391, %v880
        %v913 = vmul.bf16 %v392, %v881
        %v914 = vmul.bf16 %v393, %v882
        %v915 = vmul.bf16 %v394, %v883
        %v916 = vmul.bf16 %v395, %v884
        %v917 = vmul.bf16 %v396, %v885
        %v918 = vmul.bf16 %v397, %v886
        %v919 = vmul.bf16 %v398, %v887
        %v920 = vunpack.c.l.bf16 %v904
        %v921 = vunpack.c.h.bf16 %v904
        %v922 = vunpack.c.l.bf16 %v905
        %v923 = vunpack.c.h.bf16 %v905
        %v924 = vunpack.c.l.bf16 %v906
        %v925 = vunpack.c.h.bf16 %v906
        %v926 = vunpack.c.l.bf16 %v907
        %v927 = vunpack.c.h.bf16 %v907
        %v928 = vunpack.c.l.bf16 %v908
        %v929 = vunpack.c.h.bf16 %v908
        %v930 = vunpack.c.l.bf16 %v909
        %v931 = vunpack.c.h.bf16 %v909
        %v932 = vunpack.c.l.bf16 %v910
        %v933 = vunpack.c.h.bf16 %v910
        %v934 = vunpack.c.l.bf16 %v911
        %v935 = vunpack.c.h.bf16 %v911
        %v936 = vunpack.c.l.bf16 %v912
        %v937 = vunpack.c.h.bf16 %v912
        %v938 = vunpack.c.l.bf16 %v913
        %v939 = vunpack.c.h.bf16 %v913
        %v940 = vunpack.c.l.bf16 %v914
        %v941 = vunpack.c.h.bf16 %v914
        %v942 = vunpack.c.l.bf16 %v915
        %v943 = vunpack.c.h.bf16 %v915
        %v944 = vunpack.c.l.bf16 %v916
        %v945 = vunpack.c.h.bf16 %v916
        %v946 = vunpack.c.l.bf16 %v917
        %v947 = vunpack.c.h.bf16 %v917
        %v948 = vunpack.c.l.bf16 %v918
        %v949 = vunpack.c.h.bf16 %v918
        %v950 = vunpack.c.l.bf16 %v919
        %v951 = vunpack.c.h.bf16 %v919
        %v952 = vadd.f32 %v920, %v921
        %v953 = vadd.f32 %v952, %v922
        %v954 = vadd.f32 %v953, %v923
        %955 = vadd.xlane.f32.xlu0 %v954
        %v956 = vpop.xlane.xlu0 %955
        %v957 = vadd.f32 %v924, %v925
        %v958 = vadd.f32 %v957, %v926
        %v959 = vadd.f32 %v958, %v927
        %960 = vadd.xlane.f32.xlu0 %v959
        %v961 = vpop.xlane.xlu0 %960
        %v962 = vadd.f32 %v928, %v929
        %v963 = vadd.f32 %v962, %v930
        %v964 = vadd.f32 %v963, %v931
        %965 = vadd.xlane.f32.xlu0 %v964
        %v966 = vpop.xlane.xlu0 %965
        %v967 = vadd.f32 %v932, %v933
        %v968 = vadd.f32 %v967, %v934
        %v969 = vadd.f32 %v968, %v935
        %970 = vadd.xlane.f32.xlu0 %v969
        %v971 = vpop.xlane.xlu0 %970
        %v972 = vadd.f32 %v936, %v937
        %v973 = vadd.f32 %v972, %v938
        %v974 = vadd.f32 %v973, %v939
        %975 = vadd.xlane.f32.xlu0 %v974
        %v976 = vpop.xlane.xlu0 %975
        %v977 = vadd.f32 %v940, %v941
        %v978 = vadd.f32 %v977, %v942
        %v979 = vadd.f32 %v978, %v943
        %980 = vadd.xlane.f32.xlu0 %v979
        %v981 = vpop.xlane.xlu0 %980
        %v982 = vadd.f32 %v944, %v945
        %v983 = vadd.f32 %v982, %v946
        %v984 = vadd.f32 %v983, %v947
        %985 = vadd.xlane.f32.xlu0 %v984
        %v986 = vpop.xlane.xlu0 %985
        %v987 = vadd.f32 %v948, %v949
        %v988 = vadd.f32 %v987, %v950
        %v989 = vadd.f32 %v988, %v951
        %990 = vadd.xlane.f32.xlu0 %v989
        %v991 = vpop.xlane.xlu0 %990
        %v1000 = vlaneseq
        %v1001 = vand.u32 %v1000, 127
        %v1002 = vlaneseq
        %v1003 = vshrl.u32 %v1002, 7
        %v1004 = vsub.s32 %v1001, %v1003
        %v1005 = vrot.slane %v956, %v1004
        %v1006 = vlaneseq
        %v1007 = vshrl.u32 %v1006, 7
        %v1008 = vsub.s32 %v1001, %v1007
        %v1009 = vrot.slane %v961, %v1008
        %v1010 = vlaneseq
        %v1011 = vshrl.u32 %v1010, 7
        %v1012 = vsub.s32 %v1001, %v1011
        %v1013 = vrot.slane %v966, %v1012
        %v1014 = vlaneseq
        %v1015 = vshrl.u32 %v1014, 7
        %v1016 = vsub.s32 %v1001, %v1015
        %v1017 = vrot.slane %v971, %v1016
        %v1018 = vlaneseq
        %v1019 = vshrl.u32 %v1018, 7
        %v1020 = vsub.s32 %v1001, %v1019
        %v1021 = vrot.slane %v976, %v1020
        %v1022 = vlaneseq
        %v1023 = vshrl.u32 %v1022, 7
        %v1024 = vsub.s32 %v1001, %v1023
        %v1025 = vrot.slane %v981, %v1024
        %v1026 = vlaneseq
        %v1027 = vshrl.u32 %v1026, 7
        %v1028 = vsub.s32 %v1001, %v1027
        %v1029 = vrot.slane %v986, %v1028
        %v1030 = vlaneseq
        %v1031 = vshrl.u32 %v1030, 7
        %v1032 = vsub.s32 %v1001, %v1031
        %v1033 = vrot.slane %v991, %v1032
        %vm1034 = vcmask 1041409
        %v1035 = vsel %vm1034, %v1009, %v1005
        %vm1036 = vcmask 1042434
        %v1037 = vsel %vm1036, %v1013, %v1035
        %vm1038 = vcmask 1043459
        %v1039 = vsel %vm1038, %v1017, %v1037
        %vm1040 = vcmask 1044484
        %v1041 = vsel %vm1040, %v1021, %v1039
        %vm1042 = vcmask 1045509
        %v1043 = vsel %vm1042, %v1025, %v1041
        %vm1044 = vcmask 1046534
        %v1045 = vsel %vm1044, %v1029, %v1043
        %vm1046 = vcmask 1047559
        %v1047 = vsel %vm1046, %v1033, %v1045
        %v1049 = vadd.f32 %v405, %v1047
        %vm1050 = vcmask 64512
        %1051 = vst.msk [vmem:[#allocation2] sm:$0xff] %vm1050, %v1049
        %v1052 = vld [vmem:[#allocation3] sm:$0xff]
        %v1053 = vunpack.c.l.bf16 %v399
        %v1054 = vunpack.c.h.bf16 %v399
        %v1055 = vunpack.c.l.bf16 %v400
        %v1056 = vunpack.c.h.bf16 %v400
        %v1057 = vadd.f32 %v1053, %v1054
        %v1058 = vadd.f32 %v1057, %v1055
        %v1059 = vadd.f32 %v1058, %v1056
        %1060 = vadd.xlane.f32.xlu0 %v1059
        %v1061 = vpop.xlane.xlu0 %1060
        %v1062 = vadd.f32 %v1052, %v1061
        %vm1063 = vcmask 7168
        %1064 = vst.msk [vmem:[#allocation3] sm:$0xff] %vm1063, %v1062
        %vm1065 = vcmp.ne.s32.totalorder %v401, 4294967196
        %vm1066 = vcmp.ne.s32.totalorder %v402, 4294967196
        %vm1067 = vcmp.ne.s32.totalorder %v403, 4294967196
        %vm1068 = vcmp.ne.s32.totalorder %v404, 4294967196
        %v1069 = vlaneseq
        %v1070 = vshrl.u32 %v1069, 7
        %v1071 = vcombine.low %v401, %v402
        %v1072 = vcombine.high %v401, %v402
        %v1073 = vcombine.low %v403, %v404
        %v1074 = vcombine.high %v403, %v404
        %v1076 = vunpack.c.l.s4 1966171168
        %v1077 = vunpack.c.0.s8 %v1076
        %v1078 = vlaneseq
        %v1079 = vshrl.u32 %v1078, 7
        %v1080 = vsub.s32 %v1077, %v1079
        %v1081 = vrot.slane %v1071, %v1080
        %v1083 = vunpack.c.l.s4 1966171168
        %v1084 = vunpack.c.0.s8 %v1083
        %v1085 = vlaneseq
        %v1086 = vshrl.u32 %v1085, 7
        %v1087 = vsub.s32 %v1084, %v1086
        %v1088 = vrot.slane %v1072, %v1087
        %v1090 = vunpack.c.l.s4 1966171168
        %v1091 = vunpack.c.0.s8 %v1090
        %v1092 = vlaneseq
        %v1093 = vshrl.u32 %v1092, 7
        %v1094 = vsub.s32 %v1091, %v1093
        %v1095 = vrot.slane %v1073, %v1094
        %v1097 = vunpack.c.l.s4 1966171168
        %v1098 = vunpack.c.0.s8 %v1097
        %v1099 = vlaneseq
        %v1100 = vshrl.u32 %v1099, 7
        %v1101 = vsub.s32 %v1098, %v1100
        %v1102 = vrot.slane %v1074, %v1101
        %v1103 = vcombine.low %v1081, %v1095
        %v1104 = vcombine.high %v1081, %v1095
        %v1105 = vcombine.low %v1088, %v1102
        %v1106 = vcombine.high %v1088, %v1102
        %v1108 = vunpack.c.l.s4 1966171168
        %v1109 = vunpack.c.0.s8 %v1108
        %v1110 = vlaneseq
        %v1111 = vshrl.u32 %v1110, 7
        %v1112 = vsub.s32 %v1109, %v1111
        %v1113 = vrot.slane %v1103, %v1112
        %v1115 = vunpack.c.l.s4 1966171168
        %v1116 = vunpack.c.0.s8 %v1115
        %v1117 = vlaneseq
        %v1118 = vshrl.u32 %v1117, 7
        %v1119 = vsub.s32 %v1116, %v1118
        %v1120 = vrot.slane %v1105, %v1119
        %v1122 = vunpack.c.l.s4 1966171168
        %v1123 = vunpack.c.0.s8 %v1122
        %v1124 = vlaneseq
        %v1125 = vshrl.u32 %v1124, 7
        %v1126 = vsub.s32 %v1123, %v1125
        %v1127 = vrot.slane %v1104, %v1126
        %v1129 = vunpack.c.l.s4 1966171168
        %v1130 = vunpack.c.0.s8 %v1129
        %v1131 = vlaneseq
        %v1132 = vshrl.u32 %v1131, 7
        %v1133 = vsub.s32 %v1130, %v1132
        %v1134 = vrot.slane %v1106, %v1133
        %v1135 = vcombine.high %v1113, %v1113
        %v1136 = vcombine.high %v1120, %v1120
        %v1137 = vcombine.high %v1127, %v1127
        %v1138 = vcombine.high %v1134, %v1134
        %v1139 = vlaneseq
        %v1140 = vshrl.u32 %v1139, 7
        %v1141 = vsub.s32 0, %v1140
        %v1142 = vrot.slane %v1113, %v1141
        %v1143 = vlaneseq
        %v1144 = vshrl.u32 %v1143, 7
        %v1145 = vsub.s32 1, %v1144
        %v1146 = vrot.slane %v1113, %v1145
        %v1147 = vlaneseq
        %v1148 = vshrl.u32 %v1147, 7
        %v1149 = vsub.s32 2, %v1148
        %v1150 = vrot.slane %v1113, %v1149
        %v1151 = vlaneseq
        %v1152 = vshrl.u32 %v1151, 7
        %v1153 = vsub.s32 3, %v1152
        %v1154 = vrot.slane %v1113, %v1153
        %v1155 = vlaneseq
        %v1156 = vshrl.u32 %v1155, 7
        %v1157 = vsub.s32 0, %v1156
        %v1158 = vrot.slane %v1127, %v1157
        %v1159 = vlaneseq
        %v1160 = vshrl.u32 %v1159, 7
        %v1161 = vsub.s32 1, %v1160
        %v1162 = vrot.slane %v1127, %v1161
        %v1163 = vlaneseq
        %v1164 = vshrl.u32 %v1163, 7
        %v1165 = vsub.s32 2, %v1164
        %v1166 = vrot.slane %v1127, %v1165
        %v1167 = vlaneseq
        %v1168 = vshrl.u32 %v1167, 7
        %v1169 = vsub.s32 3, %v1168
        %v1170 = vrot.slane %v1127, %v1169
        %v1171 = vlaneseq
        %v1172 = vshrl.u32 %v1171, 7
        %v1173 = vsub.s32 0, %v1172
        %v1174 = vrot.slane %v1135, %v1173
        %v1175 = vlaneseq
        %v1176 = vshrl.u32 %v1175, 7
        %v1177 = vsub.s32 1, %v1176
        %v1178 = vrot.slane %v1135, %v1177
        %v1179 = vlaneseq
        %v1180 = vshrl.u32 %v1179, 7
        %v1181 = vsub.s32 2, %v1180
        %v1182 = vrot.slane %v1135, %v1181
        %v1183 = vlaneseq
        %v1184 = vshrl.u32 %v1183, 7
        %v1185 = vsub.s32 3, %v1184
        %v1186 = vrot.slane %v1135, %v1185
        %v1187 = vlaneseq
        %v1188 = vshrl.u32 %v1187, 7
        %v1189 = vsub.s32 0, %v1188
        %v1190 = vrot.slane %v1137, %v1189
        %v1191 = vlaneseq
        %v1192 = vshrl.u32 %v1191, 7
        %v1193 = vsub.s32 1, %v1192
        %v1194 = vrot.slane %v1137, %v1193
        %v1195 = vlaneseq
        %v1196 = vshrl.u32 %v1195, 7
        %v1197 = vsub.s32 2, %v1196
        %v1198 = vrot.slane %v1137, %v1197
        %v1199 = vlaneseq
        %v1200 = vshrl.u32 %v1199, 7
        %v1201 = vsub.s32 3, %v1200
        %v1202 = vrot.slane %v1137, %v1201
        %v1203 = vlaneseq
        %v1204 = vshrl.u32 %v1203, 7
        %v1205 = vsub.s32 0, %v1204
        %v1206 = vrot.slane %v1120, %v1205
        %v1207 = vlaneseq
        %v1208 = vshrl.u32 %v1207, 7
        %v1209 = vsub.s32 1, %v1208
        %v1210 = vrot.slane %v1120, %v1209
        %v1211 = vlaneseq
        %v1212 = vshrl.u32 %v1211, 7
        %v1213 = vsub.s32 2, %v1212
        %v1214 = vrot.slane %v1120, %v1213
        %v1215 = vlaneseq
        %v1216 = vshrl.u32 %v1215, 7
        %v1217 = vsub.s32 3, %v1216
        %v1218 = vrot.slane %v1120, %v1217
        %v1219 = vlaneseq
        %v1220 = vshrl.u32 %v1219, 7
        %v1221 = vsub.s32 0, %v1220
        %v1222 = vrot.slane %v1134, %v1221
        %v1223 = vlaneseq
        %v1224 = vshrl.u32 %v1223, 7
        %v1225 = vsub.s32 1, %v1224
        %v1226 = vrot.slane %v1134, %v1225
        %v1227 = vlaneseq
        %v1228 = vshrl.u32 %v1227, 7
        %v1229 = vsub.s32 2, %v1228
        %v1230 = vrot.slane %v1134, %v1229
        %v1231 = vlaneseq
        %v1232 = vshrl.u32 %v1231, 7
        %v1233 = vsub.s32 3, %v1232
        %v1234 = vrot.slane %v1134, %v1233
        %v1235 = vlaneseq
        %v1236 = vshrl.u32 %v1235, 7
        %v1237 = vsub.s32 0, %v1236
        %v1238 = vrot.slane %v1136, %v1237
        %v1239 = vlaneseq
        %v1240 = vshrl.u32 %v1239, 7
        %v1241 = vsub.s32 1, %v1240
        %v1242 = vrot.slane %v1136, %v1241
        %v1243 = vlaneseq
        %v1244 = vshrl.u32 %v1243, 7
        %v1245 = vsub.s32 2, %v1244
        %v1246 = vrot.slane %v1136, %v1245
        %v1247 = vlaneseq
        %v1248 = vshrl.u32 %v1247, 7
        %v1249 = vsub.s32 3, %v1248
        %v1250 = vrot.slane %v1136, %v1249
        %v1251 = vlaneseq
        %v1252 = vshrl.u32 %v1251, 7
        %v1253 = vsub.s32 0, %v1252
        %v1254 = vrot.slane %v1138, %v1253
        %v1255 = vlaneseq
        %v1256 = vshrl.u32 %v1255, 7
        %v1257 = vsub.s32 1, %v1256
        %v1258 = vrot.slane %v1138, %v1257
        %v1259 = vlaneseq
        %v1260 = vshrl.u32 %v1259, 7
        %v1261 = vsub.s32 2, %v1260
        %v1262 = vrot.slane %v1138, %v1261
        %v1263 = vlaneseq
        %v1264 = vshrl.u32 %v1263, 7
        %v1265 = vsub.s32 3, %v1264
        %v1266 = vrot.slane %v1138, %v1265
        %vm1267 = vcmp.eq.s32.totalorder %v1142, %v1070
        %vm1268 = vcmp.eq.s32.totalorder %v1146, %v1070
        %vm1269 = vcmp.eq.s32.totalorder %v1150, %v1070
        %vm1270 = vcmp.eq.s32.totalorder %v1154, %v1070
        %vm1271 = vcmp.eq.s32.totalorder %v1158, %v1070
        %vm1272 = vcmp.eq.s32.totalorder %v1162, %v1070
        %vm1273 = vcmp.eq.s32.totalorder %v1166, %v1070
        %vm1274 = vcmp.eq.s32.totalorder %v1170, %v1070
        %vm1275 = vcmp.eq.s32.totalorder %v1174, %v1070
        %vm1276 = vcmp.eq.s32.totalorder %v1178, %v1070
        %vm1277 = vcmp.eq.s32.totalorder %v1182, %v1070
        %vm1278 = vcmp.eq.s32.totalorder %v1186, %v1070
        %vm1279 = vcmp.eq.s32.totalorder %v1190, %v1070
        %vm1280 = vcmp.eq.s32.totalorder %v1194, %v1070
        %vm1281 = vcmp.eq.s32.totalorder %v1198, %v1070
        %vm1282 = vcmp.eq.s32.totalorder %v1202, %v1070
        %vm1283 = vcmp.eq.s32.totalorder %v1206, %v1070
        %vm1284 = vcmp.eq.s32.totalorder %v1210, %v1070
        %vm1285 = vcmp.eq.s32.totalorder %v1214, %v1070
        %vm1286 = vcmp.eq.s32.totalorder %v1218, %v1070
        %vm1287 = vcmp.eq.s32.totalorder %v1222, %v1070
        %vm1288 = vcmp.eq.s32.totalorder %v1226, %v1070
        %vm1289 = vcmp.eq.s32.totalorder %v1230, %v1070
        %vm1290 = vcmp.eq.s32.totalorder %v1234, %v1070
        %vm1291 = vcmp.eq.s32.totalorder %v1238, %v1070
        %vm1292 = vcmp.eq.s32.totalorder %v1242, %v1070
        %vm1293 = vcmp.eq.s32.totalorder %v1246, %v1070
        %vm1294 = vcmp.eq.s32.totalorder %v1250, %v1070
        %vm1295 = vcmp.eq.s32.totalorder %v1254, %v1070
        %vm1296 = vcmp.eq.s32.totalorder %v1258, %v1070
        %vm1297 = vcmp.eq.s32.totalorder %v1262, %v1070
        %vm1298 = vcmp.eq.s32.totalorder %v1266, %v1070
        %v1299 = vsel %vm1065, 1, 0
        %v1300 = vsel %vm1066, 1, 0
        %v1301 = vsel %vm1067, 1, 0
        %v1302 = vsel %vm1068, 1, 0
        %v1303 = vcombine.low %v1299, %v1300
        %v1304 = vcombine.high %v1299, %v1300
        %v1305 = vcombine.low %v1301, %v1302
        %v1306 = vcombine.high %v1301, %v1302
        %v1308 = vunpack.c.l.s4 1966171168
        %v1309 = vunpack.c.0.s8 %v1308
        %v1310 = vlaneseq
        %v1311 = vshrl.u32 %v1310, 7
        %v1312 = vsub.s32 %v1309, %v1311
        %v1313 = vrot.slane %v1303, %v1312
        %v1315 = vunpack.c.l.s4 1966171168
        %v1316 = vunpack.c.0.s8 %v1315
        %v1317 = vlaneseq
        %v1318 = vshrl.u32 %v1317, 7
        %v1319 = vsub.s32 %v1316, %v1318
        %v1320 = vrot.slane %v1304, %v1319
        %v1322 = vunpack.c.l.s4 1966171168
        %v1323 = vunpack.c.0.s8 %v1322
        %v1324 = vlaneseq
        %v1325 = vshrl.u32 %v1324, 7
        %v1326 = vsub.s32 %v1323, %v1325
        %v1327 = vrot.slane %v1305, %v1326
        %v1329 = vunpack.c.l.s4 1966171168
        %v1330 = vunpack.c.0.s8 %v1329
        %v1331 = vlaneseq
        %v1332 = vshrl.u32 %v1331, 7
        %v1333 = vsub.s32 %v1330, %v1332
        %v1334 = vrot.slane %v1306, %v1333
        %v1335 = vcombine.low %v1313, %v1327
        %v1336 = vcombine.high %v1313, %v1327
        %v1337 = vcombine.low %v1320, %v1334
        %v1338 = vcombine.high %v1320, %v1334
        %v1340 = vunpack.c.l.s4 1966171168
        %v1341 = vunpack.c.0.s8 %v1340
        %v1342 = vlaneseq
        %v1343 = vshrl.u32 %v1342, 7
        %v1344 = vsub.s32 %v1341, %v1343
        %v1345 = vrot.slane %v1335, %v1344
        %v1347 = vunpack.c.l.s4 1966171168
        %v1348 = vunpack.c.0.s8 %v1347
        %v1349 = vlaneseq
        %v1350 = vshrl.u32 %v1349, 7
        %v1351 = vsub.s32 %v1348, %v1350
        %v1352 = vrot.slane %v1337, %v1351
        %v1354 = vunpack.c.l.s4 1966171168
        %v1355 = vunpack.c.0.s8 %v1354
        %v1356 = vlaneseq
        %v1357 = vshrl.u32 %v1356, 7
        %v1358 = vsub.s32 %v1355, %v1357
        %v1359 = vrot.slane %v1336, %v1358
        %v1361 = vunpack.c.l.s4 1966171168
        %v1362 = vunpack.c.0.s8 %v1361
        %v1363 = vlaneseq
        %v1364 = vshrl.u32 %v1363, 7
        %v1365 = vsub.s32 %v1362, %v1364
        %v1366 = vrot.slane %v1338, %v1365
        %v1367 = vcombine.high %v1345, %v1345
        %v1368 = vcombine.high %v1352, %v1352
        %v1369 = vcombine.high %v1359, %v1359
        %v1370 = vcombine.high %v1366, %v1366
        %vm1371 = vcmp.ne.s32.totalorder %v1345, 0
        %vm1372 = vcmp.ne.s32.totalorder %v1359, 0
        %vm1373 = vcmp.ne.s32.totalorder %v1367, 0
        %vm1374 = vcmp.ne.s32.totalorder %v1369, 0
        %vm1375 = vcmp.ne.s32.totalorder %v1352, 0
        %vm1376 = vcmp.ne.s32.totalorder %v1366, 0
        %vm1377 = vcmp.ne.s32.totalorder %v1368, 0
        %vm1378 = vcmp.ne.s32.totalorder %v1370, 0
        %v1379 = vsel %vm1371, 1, 0
        %v1380 = vsel %vm1372, 1, 0
        %v1381 = vsel %vm1373, 1, 0
        %v1382 = vsel %vm1374, 1, 0
        %v1383 = vsel %vm1375, 1, 0
        %v1384 = vsel %vm1376, 1, 0
        %v1385 = vsel %vm1377, 1, 0
        %v1386 = vsel %vm1378, 1, 0
        %v1387 = vlaneseq
        %v1388 = vshrl.u32 %v1387, 7
        %v1389 = vsub.s32 0, %v1388
        %v1390 = vrot.slane %v1379, %v1389
        %v1391 = vlaneseq
        %v1392 = vshrl.u32 %v1391, 7
        %v1393 = vsub.s32 1, %v1392
        %v1394 = vrot.slane %v1379, %v1393
        %v1395 = vlaneseq
        %v1396 = vshrl.u32 %v1395, 7
        %v1397 = vsub.s32 2, %v1396
        %v1398 = vrot.slane %v1379, %v1397
        %v1399 = vlaneseq
        %v1400 = vshrl.u32 %v1399, 7
        %v1401 = vsub.s32 3, %v1400
        %v1402 = vrot.slane %v1379, %v1401
        %v1403 = vlaneseq
        %v1404 = vshrl.u32 %v1403, 7
        %v1405 = vsub.s32 0, %v1404
        %v1406 = vrot.slane %v1380, %v1405
        %v1407 = vlaneseq
        %v1408 = vshrl.u32 %v1407, 7
        %v1409 = vsub.s32 1, %v1408
        %v1410 = vrot.slane %v1380, %v1409
        %v1411 = vlaneseq
        %v1412 = vshrl.u32 %v1411, 7
        %v1413 = vsub.s32 2, %v1412
        %v1414 = vrot.slane %v1380, %v1413
        %v1415 = vlaneseq
        %v1416 = vshrl.u32 %v1415, 7
        %v1417 = vsub.s32 3, %v1416
        %v1418 = vrot.slane %v1380, %v1417
        %v1419 = vlaneseq
        %v1420 = vshrl.u32 %v1419, 7
        %v1421 = vsub.s32 0, %v1420
        %v1422 = vrot.slane %v1381, %v1421
        %v1423 = vlaneseq
        %v1424 = vshrl.u32 %v1423, 7
        %v1425 = vsub.s32 1, %v1424
        %v1426 = vrot.slane %v1381, %v1425
        %v1427 = vlaneseq
        %v1428 = vshrl.u32 %v1427, 7
        %v1429 = vsub.s32 2, %v1428
        %v1430 = vrot.slane %v1381, %v1429
        %v1431 = vlaneseq
        %v1432 = vshrl.u32 %v1431, 7
        %v1433 = vsub.s32 3, %v1432
        %v1434 = vrot.slane %v1381, %v1433
        %v1435 = vlaneseq
        %v1436 = vshrl.u32 %v1435, 7
        %v1437 = vsub.s32 0, %v1436
        %v1438 = vrot.slane %v1382, %v1437
        %v1439 = vlaneseq
        %v1440 = vshrl.u32 %v1439, 7
        %v1441 = vsub.s32 1, %v1440
        %v1442 = vrot.slane %v1382, %v1441
        %v1443 = vlaneseq
        %v1444 = vshrl.u32 %v1443, 7
        %v1445 = vsub.s32 2, %v1444
        %v1446 = vrot.slane %v1382, %v1445
        %v1447 = vlaneseq
        %v1448 = vshrl.u32 %v1447, 7
        %v1449 = vsub.s32 3, %v1448
        %v1450 = vrot.slane %v1382, %v1449
        %v1451 = vlaneseq
        %v1452 = vshrl.u32 %v1451, 7
        %v1453 = vsub.s32 0, %v1452
        %v1454 = vrot.slane %v1383, %v1453
        %v1455 = vlaneseq
        %v1456 = vshrl.u32 %v1455, 7
        %v1457 = vsub.s32 1, %v1456
        %v1458 = vrot.slane %v1383, %v1457
        %v1459 = vlaneseq
        %v1460 = vshrl.u32 %v1459, 7
        %v1461 = vsub.s32 2, %v1460
        %v1462 = vrot.slane %v1383, %v1461
        %v1463 = vlaneseq
        %v1464 = vshrl.u32 %v1463, 7
        %v1465 = vsub.s32 3, %v1464
        %v1466 = vrot.slane %v1383, %v1465
        %v1467 = vlaneseq
        %v1468 = vshrl.u32 %v1467, 7
        %v1469 = vsub.s32 0, %v1468
        %v1470 = vrot.slane %v1384, %v1469
        %v1471 = vlaneseq
        %v1472 = vshrl.u32 %v1471, 7
        %v1473 = vsub.s32 1, %v1472
        %v1474 = vrot.slane %v1384, %v1473
        %v1475 = vlaneseq
        %v1476 = vshrl.u32 %v1475, 7
        %v1477 = vsub.s32 2, %v1476
        %v1478 = vrot.slane %v1384, %v1477
        %v1479 = vlaneseq
        %v1480 = vshrl.u32 %v1479, 7
        %v1481 = vsub.s32 3, %v1480
        %v1482 = vrot.slane %v1384, %v1481
        %v1483 = vlaneseq
        %v1484 = vshrl.u32 %v1483, 7
        %v1485 = vsub.s32 0, %v1484
        %v1486 = vrot.slane %v1385, %v1485
        %v1487 = vlaneseq
        %v1488 = vshrl.u32 %v1487, 7
        %v1489 = vsub.s32 1, %v1488
        %v1490 = vrot.slane %v1385, %v1489
        %v1491 = vlaneseq
        %v1492 = vshrl.u32 %v1491, 7
        %v1493 = vsub.s32 2, %v1492
        %v1494 = vrot.slane %v1385, %v1493
        %v1495 = vlaneseq
        %v1496 = vshrl.u32 %v1495, 7
        %v1497 = vsub.s32 3, %v1496
        %v1498 = vrot.slane %v1385, %v1497
        %v1499 = vlaneseq
        %v1500 = vshrl.u32 %v1499, 7
        %v1501 = vsub.s32 0, %v1500
        %v1502 = vrot.slane %v1386, %v1501
        %v1503 = vlaneseq
        %v1504 = vshrl.u32 %v1503, 7
        %v1505 = vsub.s32 1, %v1504
        %v1506 = vrot.slane %v1386, %v1505
        %v1507 = vlaneseq
        %v1508 = vshrl.u32 %v1507, 7
        %v1509 = vsub.s32 2, %v1508
        %v1510 = vrot.slane %v1386, %v1509
        %v1511 = vlaneseq
        %v1512 = vshrl.u32 %v1511, 7
        %v1513 = vsub.s32 3, %v1512
        %v1514 = vrot.slane %v1386, %v1513
        %vm1515 = vcmp.eq.s32.totalorder %v1390, 1
        %vm1516 = vcmp.eq.s32.totalorder %v1394, 1
        %vm1517 = vcmp.eq.s32.totalorder %v1398, 1
        %vm1518 = vcmp.eq.s32.totalorder %v1402, 1
        %vm1519 = vcmp.eq.s32.totalorder %v1406, 1
        %vm1520 = vcmp.eq.s32.totalorder %v1410, 1
        %vm1521 = vcmp.eq.s32.totalorder %v1414, 1
        %vm1522 = vcmp.eq.s32.totalorder %v1418, 1
        %vm1523 = vcmp.eq.s32.totalorder %v1422, 1
        %vm1524 = vcmp.eq.s32.totalorder %v1426, 1
        %vm1525 = vcmp.eq.s32.totalorder %v1430, 1
        %vm1526 = vcmp.eq.s32.totalorder %v1434, 1
        %vm1527 = vcmp.eq.s32.totalorder %v1438, 1
        %vm1528 = vcmp.eq.s32.totalorder %v1442, 1
        %vm1529 = vcmp.eq.s32.totalorder %v1446, 1
        %vm1530 = vcmp.eq.s32.totalorder %v1450, 1
        %vm1531 = vcmp.eq.s32.totalorder %v1454, 1
        %vm1532 = vcmp.eq.s32.totalorder %v1458, 1
        %vm1533 = vcmp.eq.s32.totalorder %v1462, 1
        %vm1534 = vcmp.eq.s32.totalorder %v1466, 1
        %vm1535 = vcmp.eq.s32.totalorder %v1470, 1
        %vm1536 = vcmp.eq.s32.totalorder %v1474, 1
        %vm1537 = vcmp.eq.s32.totalorder %v1478, 1
        %vm1538 = vcmp.eq.s32.totalorder %v1482, 1
        %vm1539 = vcmp.eq.s32.totalorder %v1486, 1
        %vm1540 = vcmp.eq.s32.totalorder %v1490, 1
        %vm1541 = vcmp.eq.s32.totalorder %v1494, 1
        %vm1542 = vcmp.eq.s32.totalorder %v1498, 1
        %vm1543 = vcmp.eq.s32.totalorder %v1502, 1
        %vm1544 = vcmp.eq.s32.totalorder %v1506, 1
        %vm1545 = vcmp.eq.s32.totalorder %v1510, 1
        %vm1546 = vcmp.eq.s32.totalorder %v1514, 1
        %vm1547 = vmand %vm1267, %vm1515
        %vm1548 = vmand %vm1268, %vm1516
        %vm1549 = vmand %vm1269, %vm1517
        %vm1550 = vmand %vm1270, %vm1518
        %vm1551 = vmand %vm1271, %vm1519
        %vm1552 = vmand %vm1272, %vm1520
        %vm1553 = vmand %vm1273, %vm1521
        %vm1554 = vmand %vm1274, %vm1522
        %vm1555 = vmand %vm1275, %vm1523
        %vm1556 = vmand %vm1276, %vm1524
        %vm1557 = vmand %vm1277, %vm1525
        %vm1558 = vmand %vm1278, %vm1526
        %vm1559 = vmand %vm1279, %vm1527
        %vm1560 = vmand %vm1280, %vm1528
        %vm1561 = vmand %vm1281, %vm1529
        %vm1562 = vmand %vm1282, %vm1530
        %vm1563 = vmand %vm1283, %vm1531
        %vm1564 = vmand %vm1284, %vm1532
        %vm1565 = vmand %vm1285, %vm1533
        %vm1566 = vmand %vm1286, %vm1534
        %vm1567 = vmand %vm1287, %vm1535
        %vm1568 = vmand %vm1288, %vm1536
        %vm1569 = vmand %vm1289, %vm1537
        %vm1570 = vmand %vm1290, %vm1538
        %vm1571 = vmand %vm1291, %vm1539
        %vm1572 = vmand %vm1292, %vm1540
        %vm1573 = vmand %vm1293, %vm1541
        %vm1574 = vmand %vm1294, %vm1542
        %vm1575 = vmand %vm1295, %vm1543
        %vm1576 = vmand %vm1296, %vm1544
        %vm1577 = vmand %vm1297, %vm1545
        %vm1578 = vmand %vm1298, %vm1546
        %v1579 = vld [vmem:[#allocation4] sm:$0xff]
        %v1580 = vsel %vm1547, 1, 0
        %v1581 = vsel %vm1548, 1, 0
        %v1582 = vsel %vm1549, 1, 0
        %v1583 = vsel %vm1550, 1, 0
        %v1584 = vsel %vm1551, 1, 0
        %v1585 = vsel %vm1552, 1, 0
        %v1586 = vsel %vm1553, 1, 0
        %v1587 = vsel %vm1554, 1, 0
        %v1588 = vsel %vm1555, 1, 0
        %v1589 = vsel %vm1556, 1, 0
        %v1590 = vsel %vm1557, 1, 0
        %v1591 = vsel %vm1558, 1, 0
        %v1592 = vsel %vm1559, 1, 0
        %v1593 = vsel %vm1560, 1, 0
        %v1594 = vsel %vm1561, 1, 0
        %v1595 = vsel %vm1562, 1, 0
        %v1596 = vsel %vm1563, 1, 0
        %v1597 = vsel %vm1564, 1, 0
        %v1598 = vsel %vm1565, 1, 0
        %v1599 = vsel %vm1566, 1, 0
        %v1600 = vsel %vm1567, 1, 0
        %v1601 = vsel %vm1568, 1, 0
        %v1602 = vsel %vm1569, 1, 0
        %v1603 = vsel %vm1570, 1, 0
        %v1604 = vsel %vm1571, 1, 0
        %v1605 = vsel %vm1572, 1, 0
        %v1606 = vsel %vm1573, 1, 0
        %v1607 = vsel %vm1574, 1, 0
        %v1608 = vsel %vm1575, 1, 0
        %v1609 = vsel %vm1576, 1, 0
        %v1610 = vsel %vm1577, 1, 0
        %v1611 = vsel %vm1578, 1, 0
        %v1612 = vcvt.s32.f32 %v1580
        %v1613 = vcvt.s32.f32 %v1581
        %v1614 = vcvt.s32.f32 %v1582
        %v1615 = vcvt.s32.f32 %v1583
        %v1616 = vcvt.s32.f32 %v1584
        %v1617 = vcvt.s32.f32 %v1585
        %v1618 = vcvt.s32.f32 %v1586
        %v1619 = vcvt.s32.f32 %v1587
        %v1620 = vcvt.s32.f32 %v1588
        %v1621 = vcvt.s32.f32 %v1589
        %v1622 = vcvt.s32.f32 %v1590
        %v1623 = vcvt.s32.f32 %v1591
        %v1624 = vcvt.s32.f32 %v1592
        %v1625 = vcvt.s32.f32 %v1593
        %v1626 = vcvt.s32.f32 %v1594
        %v1627 = vcvt.s32.f32 %v1595
        %v1628 = vcvt.s32.f32 %v1596
        %v1629 = vcvt.s32.f32 %v1597
        %v1630 = vcvt.s32.f32 %v1598
        %v1631 = vcvt.s32.f32 %v1599
        %v1632 = vcvt.s32.f32 %v1600
        %v1633 = vcvt.s32.f32 %v1601
        %v1634 = vcvt.s32.f32 %v1602
        %v1635 = vcvt.s32.f32 %v1603
        %v1636 = vcvt.s32.f32 %v1604
        %v1637 = vcvt.s32.f32 %v1605
        %v1638 = vcvt.s32.f32 %v1606
        %v1639 = vcvt.s32.f32 %v1607
        %v1640 = vcvt.s32.f32 %v1608
        %v1641 = vcvt.s32.f32 %v1609
        %v1642 = vcvt.s32.f32 %v1610
        %v1643 = vcvt.s32.f32 %v1611
        %v1644 = vadd.f32 %v1612, %v1613
        %v1645 = vadd.f32 %v1644, %v1614
        %v1646 = vadd.f32 %v1645, %v1615
        %1647 = vadd.xlane.f32.xlu0 %v1646
        %v1648 = vpop.xlane.xlu0 %1647
        %v1649 = vadd.f32 %v1616, %v1617
        %v1650 = vadd.f32 %v1649, %v1618
        %v1651 = vadd.f32 %v1650, %v1619
        %1652 = vadd.xlane.f32.xlu0 %v1651
        %v1653 = vpop.xlane.xlu0 %1652
        %v1654 = vadd.f32 %v1620, %v1621
        %v1655 = vadd.f32 %v1654, %v1622
        %v1656 = vadd.f32 %v1655, %v1623
        %1657 = vadd.xlane.f32.xlu0 %v1656
        %v1658 = vpop.xlane.xlu0 %1657
        %v1659 = vadd.f32 %v1624, %v1625
        %v1660 = vadd.f32 %v1659, %v1626
        %v1661 = vadd.f32 %v1660, %v1627
        %1662 = vadd.xlane.f32.xlu0 %v1661
        %v1663 = vpop.xlane.xlu0 %1662
        %v1664 = vadd.f32 %v1628, %v1629
        %v1665 = vadd.f32 %v1664, %v1630
        %v1666 = vadd.f32 %v1665, %v1631
        %1667 = vadd.xlane.f32.xlu0 %v1666
        %v1668 = vpop.xlane.xlu0 %1667
        %v1669 = vadd.f32 %v1632, %v1633
        %v1670 = vadd.f32 %v1669, %v1634
        %v1671 = vadd.f32 %v1670, %v1635
        %1672 = vadd.xlane.f32.xlu0 %v1671
        %v1673 = vpop.xlane.xlu0 %1672
        %v1674 = vadd.f32 %v1636, %v1637
        %v1675 = vadd.f32 %v1674, %v1638
        %v1676 = vadd.f32 %v1675, %v1639
        %1677 = vadd.xlane.f32.xlu0 %v1676
        %v1678 = vpop.xlane.xlu0 %1677
        %v1679 = vadd.f32 %v1640, %v1641
        %v1680 = vadd.f32 %v1679, %v1642
        %v1681 = vadd.f32 %v1680, %v1643
        %1682 = vadd.xlane.f32.xlu0 %v1681
        %v1683 = vpop.xlane.xlu0 %1682
        %v1692 = vlaneseq
        %v1693 = vshrl.u32 %v1692, 7
        %v1694 = vsub.s32 %v1001, %v1693
        %v1695 = vrot.slane %v1648, %v1694
        %v1696 = vlaneseq
        %v1697 = vshrl.u32 %v1696, 7
        %v1698 = vsub.s32 %v1001, %v1697
        %v1699 = vrot.slane %v1653, %v1698
        %v1700 = vlaneseq
        %v1701 = vshrl.u32 %v1700, 7
        %v1702 = vsub.s32 %v1001, %v1701
        %v1703 = vrot.slane %v1658, %v1702
        %v1704 = vlaneseq
        %v1705 = vshrl.u32 %v1704, 7
        %v1706 = vsub.s32 %v1001, %v1705
        %v1707 = vrot.slane %v1663, %v1706
        %v1708 = vlaneseq
        %v1709 = vshrl.u32 %v1708, 7
        %v1710 = vsub.s32 %v1001, %v1709
        %v1711 = vrot.slane %v1668, %v1710
        %v1712 = vlaneseq
        %v1713 = vshrl.u32 %v1712, 7
        %v1714 = vsub.s32 %v1001, %v1713
        %v1715 = vrot.slane %v1673, %v1714
        %v1716 = vlaneseq
        %v1717 = vshrl.u32 %v1716, 7
        %v1718 = vsub.s32 %v1001, %v1717
        %v1719 = vrot.slane %v1678, %v1718
        %v1720 = vlaneseq
        %v1721 = vshrl.u32 %v1720, 7
        %v1722 = vsub.s32 %v1001, %v1721
        %v1723 = vrot.slane %v1683, %v1722
        %v1724 = vsel %vm1034, %v1699, %v1695
        %v1725 = vsel %vm1036, %v1703, %v1724
        %v1726 = vsel %vm1038, %v1707, %v1725
        %v1727 = vsel %vm1040, %v1711, %v1726
        %v1728 = vsel %vm1042, %v1715, %v1727
        %v1729 = vsel %vm1044, %v1719, %v1728
        %v1730 = vsel %vm1046, %v1723, %v1729
        %v1732 = vadd.f32 %v1579, %v1730
        %1733 = vst.msk [vmem:[#allocation4] sm:$0xff] %vm1050, %v1732
        %v1734 = vld [vmem:[#allocation5] sm:$0xff]
        %v1735 = vcvt.s32.f32 %v1299
        %v1736 = vcvt.s32.f32 %v1300
        %v1737 = vcvt.s32.f32 %v1301
        %v1738 = vcvt.s32.f32 %v1302
        %v1739 = vadd.f32 %v1735, %v1736
        %v1740 = vadd.f32 %v1739, %v1737
        %v1741 = vadd.f32 %v1740, %v1738
        %1742 = vadd.xlane.f32.xlu0 %v1741
        %v1743 = vpop.xlane.xlu0 %1742
        %v1744 = vadd.f32 %v1734, %v1743
        %1745 = vst.msk [vmem:[#allocation5] sm:$0xff] %vm1063, %v1744
        %p1746 = scmp.eq.s32.totalorder %s28, 1
        // Predicated region
        $region53: #{tpu_custom_call.1} parent=35 // pred_check
          %p1747 = pneg %p1746
        $region54: #{tpu_custom_call.1} parent=35 // pred_check_branch
          %1749 = sbr.rel (%p1747) target = $region56
        $region55: #{tpu_custom_call.1} parent=35 // pred_region
          %v1750 = vld [vmem:[#allocation2] sm:$0xff]
          %v1751 = vld [vmem:[#allocation3] sm:$0xff]
          %v1752 = vadd.f32 %v1751, 1e-10
          %1754 = vset.pattern.permute.xlu0 0
          %1755 = vperm.xlu0 %1754, %v1752
          %v1756 = vpop.permute.xlu0 %1755
          %v1758 = vrcp.pop %v1756
          %v1759 = vmul.f32 %v1750, %v1758
          %v1760 = vld [vmem:[#allocation4] sm:$0xff]
          %v1761 = vmul.f32 %v1760, 0.0009765625
          %v1762 = vld [vmem:[#allocation5] sm:$0xff]
          %vm1763 = vcmp.gt.f32.partialorder %v1762, 0.0
          %v1764 = vsel %vm1763, 1, 0
          %v1765 = vcvt.s32.f32 %v1764
          %v1766 = vsel %vm1050, %v1759, -inf
          %1767 = vmax.xlane.f32.xlu0 %v1766
          %v1768 = vpop.xlane.xlu0 %1767
          %v1769 = vsub.f32 %v1759, %v1768
          %v1770 = vmul.f32 %v1769, 1.442695
          %v1771 = vpow.pop %v1770
          %v1772 = vsel %vm1050, %v1771, 0.0
          %1773 = vadd.xlane.f32.xlu0 %v1772
          %v1774 = vpop.xlane.xlu0 %1773
          %v1775 = vlog2.pop %v1774
          %v1776 = vmul.f32 %v1775, 0.6931472
          %v1777 = vsub.f32 %v1769, %v1776
          %v1778 = vmul.f32 %v1761, %v1777
          %v1779 = vsel %vm1050, %v1778, 0.0
          %1780 = vadd.xlane.f32.xlu0 %v1779
          %v1781 = vpop.xlane.xlu0 %1780
          %v1782 = vsub.f32 0.0, %v1781
          %v1783 = vld [vmem:[%s364] sm:$0xff]
          %v1784 = vmul.f32 %v1782, %v1765
          %v1785 = vadd.f32 %v1783, 1e-10
          %v1786 = vrcp.pop %v1785
          %v1787 = vmul.f32 %v1784, %v1786
          %1788 = vst.msk [vmem:[%s368] sm:$0xff] %vm1063, %v1787
          %1789 = vst.msk [vmem:[%s372] sm:$0xff] %vm1063, %v1765
        $region56: #{tpu_custom_call.1} parent=35 // pred_fallthru
          _
        %p1790 = scmp.lt.s32.totalorder %s27, 1
        %s1791 = scalar_select %p1790, %s27, 1
        %s1792 = smul.addr %s1791, 8
        %s1793 = scalar_lea.vmem %s4, %s1792
        %p1794 = scmp.lt.s32.totalorder %s27, 1
        %s1795 = scalar_select %p1794, %s27, 1
        %s1796 = smul.addr %s1795, 8
        %s1797 = scalar_lea.vmem %s5, %s1796
        // Predicated region
        $region57: #{tpu_custom_call.1} parent=35 // pred_check
          %p1798 = pneg %p163
        $region58: #{tpu_custom_call.1} parent=35 // pred_check_branch
          %1800 = sbr.rel (%p1798) target = $region60
        $region59: #{tpu_custom_call.1} parent=35 // pred_region
          _
        $region60: #{tpu_custom_call.1} parent=35 // pred_fallthru
          _
        // Predicated region
        $region61: #{tpu_custom_call.1} parent=35 // pred_check
          %p1801 = pneg %p189
        $region62: #{tpu_custom_call.1} parent=35 // pred_check_branch
          %1803 = sbr.rel (%p1801) target = $region64
        $region63: #{tpu_custom_call.1} parent=35 // pred_region
          _
        $region64: #{tpu_custom_call.1} parent=35 // pred_fallthru
          _
      $region36: #{tpu_custom_call.1} parent=5 // pred_fallthru
        _
      %p1804 = scmp.le.s32.totalorder 2, %s18
      // Predicated region
      $region65: #{tpu_custom_call.1} parent=5 // pred_check
        %p1805 = pneg %p1804
      $region66: #{tpu_custom_call.1} parent=5 // pred_check_branch
        %1807 = sbr.rel (%p1805) target = $region68
      $region67: #{tpu_custom_call.1} parent=5 // pred_region
        %s1808 = ssub.s32 %s18, 2
        // Predicated region
        $region69: #{tpu_custom_call.1} parent=67 // pred_check
          %p1809 = pneg %p169
        $region70: #{tpu_custom_call.1} parent=67 // pred_check_branch
          %1811 = sbr.rel (%p1809) target = $region72
        $region71: #{tpu_custom_call.1} parent=67 // pred_region
          %p1812 = scmp.lt.s32.totalorder %s29, 1
          %s1813 = scalar_select %p1812, %s29, 1
          %s1814 = smul.addr %s1813, 8
          %s1815 = scalar_lea.vmem %s4, %s1814
        $region72: #{tpu_custom_call.1} parent=67 // pred_fallthru
          _
        // Predicated region
        $region73: #{tpu_custom_call.1} parent=67 // pred_check
          %p1816 = pneg %p195
        $region74: #{tpu_custom_call.1} parent=67 // pred_check_branch
          %1818 = sbr.rel (%p1816) target = $region76
        $region75: #{tpu_custom_call.1} parent=67 // pred_region
          %p1819 = scmp.lt.s32.totalorder %s29, 1
          %s1820 = scalar_select %p1819, %s29, 1
          %s1821 = smul.addr %s1820, 8
          %s1822 = scalar_lea.vmem %s5, %s1821
        $region76: #{tpu_custom_call.1} parent=67 // pred_fallthru
          _
      $region68: #{tpu_custom_call.1} parent=5 // pred_fallthru
        _
    $region6: #{tpu_custom_call.1} parent=1 // loop_footer
      %s22 = sadd.s32 1, %s18
    $region7: #{tpu_custom_call.1} parent=1 // loop_footer_branch
      %17 = sbr.rel target = $region3
    $region8: #{tpu_custom_call.1} parent=1 // loop_exit
      _
    %1823 = vsyncpa [#allocation7], 1
    %s1824 = scalar_lea.sflag [#allocation7], 1
    %1825 = vsyncpa %s1824, 1
    %1826 = vsyncpa [#allocation9], 1
    %s1827 = scalar_lea.sflag [#allocation9], 1
    %1828 = vsyncpa %s1827, 1

</llo_original>
